<compile_context>
chip_gen: v7x
topology: tpu7x:2x2x1
jax: 0.10.0
libtpu: 0.0.40
codegen_flags: <defaults>
</compile_context>

<pallas_src>
import math
import functools

import jax
import jax.numpy as jnp
from jax import lax
from jax.experimental import pallas as pl
from jax.experimental.pallas import tpu as pltpu


def _round_up(x, m):
    return (x + m - 1) // m * m


def _convlstm_kernel(HC, Cp, NRp, Wp, KH, KW,
                     zp_ref, c_ref, w_ref, bias_ref, peep_ref,
                     ho_ref, co_ref, slab_ref, acc_ref):
    """One ConvLSTM cell step for one batch element.

    zp_ref:   (1, Cp, R_in)      bf16  padded [x ; h]: channels on sublanes,
                                       flattened padded spatial grid on lanes
    c_ref:    (1, HC, Lc)        f32   cell state (Lc >= NRp lanes, zero tail)
    w_ref:    (4*HC, KH*KW*Cp)   bf16  im2col weights (tap-major, channel-minor)
    bias_ref: (4*HC, 1)          f32   [b_i ; b_f + forget_bias ; b_g ; b_o]
    peep_ref: (3, HC, 1)         f32   [w_c_i ; w_c_f ; w_c_new_o]
    ho_ref:   (1, HC, NRp)       bf16  new hidden state
    co_ref:   (1, HC, NRp)       f32   new cell state
    slab_ref: (KH*KW*Cp, NRp)    bf16  VMEM scratch: im2col activation slab
    acc_ref:  (4*HC, NRp)        f32   VMEM scratch: conv_x(x) + conv_h(h)
    """
    zp = zp_ref[0]                               # (Cp, R_in) bf16

    # im2col: each conv tap is a static lane-offset window of the flattened
    # padded input; copy it into its sublane range of the slab.  One
    # unaligned-lane shift per tap, paid once on bf16 data.
    for t in range(KH * KW):
        dy, dx = divmod(t, KW)
        off = dy * Wp + dx
        slab_ref[t * Cp:(t + 1) * Cp, :] = zp[:, off:off + NRp]

    # Single MXU matmul with K = KH*KW*Cp, f32 accumulation; result stored
    # once to VMEM scratch (one output sweep instead of 9 read-modify-writes).
    acc_ref[...] = jnp.dot(w_ref[...], slab_ref[...],
                           preferred_element_type=jnp.float32)

    c = c_ref[0][:, :NRp]                        # (HC, NRp) f32

    def sigmoid(v):
        # One EUP tanh; no exp overflow, no approximate reciprocal.
        return 0.5 * jnp.tanh(0.5 * v) + 0.5

    def gate(k):
        # Per-gate sublane slice read straight from the accumulator at an
        # HC-aligned offset + per-channel bias; the 4 gates are never all
        # materialized at once (keeps the live vreg set small).
        return acc_ref[k * HC:(k + 1) * HC, :] + bias_ref[k * HC:(k + 1) * HC, :]

    i = sigmoid(gate(0) + peep_ref[0] * c)
    f = sigmoid(gate(1) + peep_ref[1] * c)
    g = jnp.tanh(gate(2))
    c_new = f * c + i * g
    o = sigmoid(gate(3) + peep_ref[2] * c_new)
    h_new = o * jnp.tanh(c_new)

    ho_ref[0] = h_new.astype(ho_ref.dtype)       # bf16 writeback (halved HBM)
    co_ref[0] = c_new                            # f32 (recurrent accuracy)


def conv_lstm_cell_pallas(x_nchw, h_nchw, c_nchw, params,
                          kernel_size=(3, 3), additional_forget_bias=1.0):
    """Wrapper: NCHW in / NCHW out, matching the PyTorch module semantics
    (bias=True, layer_norm=False, elementwise peepholes)."""
    KH, KW = kernel_size
    ph, pw = KH // 2, KW // 2
    B, CIN, H, W = x_nchw.shape
    HC = h_nchw.shape[1]
    C = CIN + HC
    Cp = _round_up(C, 16)            # bf16 sublane-pack granularity

    # Padded width: try to make NR = H*Wp a multiple of 128 by rounding Wp;
    # if that is too wasteful keep Wp minimal and pad NR itself up to the next
    # multiple of 128 (NRp) so stores/elementwise ops stay fully lane-dense
    # for every H/W combination.
    wp_min = W + 2 * pw
    lane_mult = 128 // math.gcd(H, 128)
    Wp = _round_up(wp_min, lane_mult)
    if Wp > 2 * wp_min:
        Wp = wp_min
    NR = H * Wp                                   # real conv output positions
    NRp = _round_up(NR, 128)                      # lane-dense block extent

    # Padded-input geometry: enough rows that every tap window
    # [off, off + NRp) stays in bounds, with >= ph zero rows above/below the
    # real content (off_max = (KH-1)*Wp + (KW-1)).
    max_off = (KH - 1) * Wp + (KW - 1)
    Hp2 = -(-(NRp + max_off) // Wp)               # ceil
    R_in = Hp2 * Wp

    # ---- glue: activations.  Cast + channel pad + both spatial pads + lane
    # tail collapse into ONE jnp.pad fusion; reshape is free.
    # TODO(synk): assembling this padded slab inside the kernel from separate
    # x/h blocks would remove one more HBM read+write of the activations.
    z = jnp.concatenate([x_nchw, h_nchw], axis=1).astype(jnp.bfloat16)
    zp = jnp.pad(z, ((0, 0), (0, Cp - C),
                     (ph, Hp2 - H - ph), (pw, Wp - W - pw)))
    zp = zp.reshape(B, Cp, R_in)                                # (B, Cp, R_in)

    # Cell state: one pad (width to Wp, height so Lc >= NRp) + reshape; f32.
    Hc2 = -(-NRp // Wp)
    Lc = Hc2 * Wp
    cf = jnp.pad(c_nchw, ((0, 0), (0, 0), (0, Hc2 - H), (0, Wp - W)))
    cf = cf.reshape(B, HC, Lc)

    # im2col weights: (4*HC, KH*KW*Cp), tap-major / channel-minor, bf16.
    w = jnp.concatenate([params["wx"], params["wh"]], axis=1)   # (4HC,C,KH,KW)
    w = jnp.pad(w, ((0, 0), (0, Cp - C), (0, 0), (0, 0)))       # zero channels
    w = jnp.transpose(w, (0, 2, 3, 1)).reshape(4 * HC, KH * KW * Cp)
    w = w.astype(jnp.bfloat16)
    Kp = KH * KW * Cp

    # Per-channel biases; additional forget bias folded into bias_f.
    bias = jnp.concatenate([
        params["bias_i"],
        params["bias_f"] + additional_forget_bias,
        params["bias_g"],
        params["bias_o"],
    ])[:, None]                                                 # (4*HC, 1)
    peep = jnp.stack([params["w_c_i"], params["w_c_f"],
                      params["w_c_new_o"]])[:, :, None]         # (3, HC, 1)

    kernel = functools.partial(_convlstm_kernel, HC, Cp, NRp, Wp, KH, KW)

    ho, co = pl.pallas_call(
        kernel,
        grid=(B,),
        in_specs=[
            pl.BlockSpec((1, Cp, R_in), lambda b: (b, 0, 0)),        # zp
            pl.BlockSpec((1, HC, Lc), lambda b: (b, 0, 0)),          # c
            pl.BlockSpec((4 * HC, Kp), lambda b: (0, 0)),            # weights
            pl.BlockSpec((4 * HC, 1), lambda b: (0, 0)),             # bias
            pl.BlockSpec((3, HC, 1), lambda b: (0, 0, 0)),           # peepholes
        ],
        out_specs=(
            pl.BlockSpec((1, HC, NRp), lambda b: (b, 0, 0)),
            pl.BlockSpec((1, HC, NRp), lambda b: (b, 0, 0)),
        ),
        out_shape=(jax.ShapeDtypeStruct((B, HC, NRp), jnp.bfloat16),  # h: bf16
                   jax.ShapeDtypeStruct((B, HC, NRp), jnp.float32)),  # c: f32
        scratch_shapes=[pltpu.VMEM((Kp, NRp), jnp.bfloat16),   # im2col slab
                        pltpu.VMEM((4 * HC, NRp), jnp.float32)],  # gate acc
        compiler_params=pltpu.CompilerParams(
            dimension_semantics=("parallel",)),
    )(zp, cf, w, bias, peep)

    # glue: drop the width/lane padding (those lanes hold junk); cast h back
    # to f32 fused with the crop to preserve the module's output dtype.
    h_new = ho[:, :, :NR].reshape(B, HC, H, Wp)[:, :, :, :W].astype(jnp.float32)
    c_new = co[:, :, :NR].reshape(B, HC, H, Wp)[:, :, :, :W]
    return h_new, c_new


def init_params(key, in_channels, hidden_channels, kh, kw):
    """Deterministic synthetic init mirroring the module's parameter shapes."""
    ks = jax.random.split(key, 9)
    stdv_x = 1.0 / math.sqrt(in_channels * kh * kw)
    stdv_h = 1.0 / math.sqrt(hidden_channels * kh * kw)
    stdv_b = 1.0 / math.sqrt(hidden_channels * kh * kw)
    HC = hidden_channels
    return {
        "wx": jax.random.uniform(ks[0], (4 * HC, in_channels, kh, kw),
                                 jnp.float32, -stdv_x, stdv_x),   # conv_x.weight
        "wh": jax.random.uniform(ks[1], (4 * HC, HC, kh, kw),
                                 jnp.float32, -stdv_h, stdv_h),   # conv_h.weight
        "bias_i": jax.random.uniform(ks[2], (HC,), jnp.float32, -stdv_b, stdv_b),
        "bias_f": jax.random.uniform(ks[3], (HC,), jnp.float32, -stdv_b, stdv_b),
        "bias_g": jax.random.uniform(ks[4], (HC,), jnp.float32, -stdv_b, stdv_b),
        "bias_o": jax.random.uniform(ks[5], (HC,), jnp.float32, -stdv_b, stdv_b),
        "w_c_i": jax.random.normal(ks[6], (HC,), jnp.float32),
        "w_c_f": jax.random.normal(ks[7], (HC,), jnp.float32),
        "w_c_new_o": jax.random.normal(ks[8], (HC,), jnp.float32),
    }


def conv_lstm_cell_reference(x, h, c, params, kernel_size=(3, 3),
                             additional_forget_bias=1.0):
    """Pure-JAX f32 reference matching the PyTorch forward (NCHW)."""
    KH, KW = kernel_size
    ph, pw = KH // 2, KW // 2
    dn = ("NCHW", "OIHW", "NCHW")
    gates = lax.conv_general_dilated(x, params["wx"], (1, 1),
                                     ((ph, ph), (pw, pw)), dimension_numbers=dn)
    gates = gates + lax.conv_general_dilated(h, params["wh"], (1, 1),
                                             ((ph, ph), (pw, pw)),
                                             dimension_numbers=dn)
    i, f, g, o = jnp.split(gates, 4, axis=1)
    bc = lambda v: v[None, :, None, None]
    i = i + bc(params["w_c_i"]) * c
    f = f + bc(params["w_c_f"]) * c
    i = i + bc(params["bias_i"])
    f = f + bc(params["bias_f"])
    g = g + bc(params["bias_g"])
    o = o + bc(params["bias_o"])
    f = f + additional_forget_bias
    i = jax.nn.sigmoid(i)
    f = jax.nn.sigmoid(f)
    g = jnp.tanh(g)
    c_new = f * c + i * g
    o = o + bc(params["w_c_new_o"]) * c_new
    o = jax.nn.sigmoid(o)
    h_new = o * jnp.tanh(c_new)
    return h_new, c_new


if __name__ == "__main__":
    B, CIN, H, W = 2, 4, 16, 16
    HC = 32
    KH = KW = 3

    key = jax.random.PRNGKey(0)
    k_param, k_x, k_h, k_c = jax.random.split(key, 4)

    params = init_params(k_param, CIN, HC, KH, KW)
    x = jax.random.normal(k_x, (B, CIN, H, W), jnp.float32)
    h = jax.random.normal(k_h, (B, HC, H, W), jnp.float32)
    c = jax.random.normal(k_c, (B, HC, H, W), jnp.float32)

    h_new, c_new = jax.jit(
        lambda x, h, c: conv_lstm_cell_pallas(x, h, c, params,
                                              kernel_size=(KH, KW),
                                              additional_forget_bias=1.0)
    )(x, h, c)
    jax.block_until_ready((h_new, c_new))

    h_ref, c_ref = conv_lstm_cell_reference(x, h, c, params,
                                            kernel_size=(KH, KW),
                                            additional_forget_bias=1.0)
    assert h_new.shape == (B, HC, H, W) and c_new.shape == (B, HC, H, W)
    # bf16 MXU inputs + bf16 h writeback vs. f32 reference: relaxed tolerance
    # as expected for mixed-precision conv-LSTM.
    assert jnp.allclose(h_new, h_ref, atol=3e-2, rtol=3e-2), "h mismatch"
    assert jnp.allclose(c_new, c_ref, atol=3e-2, rtol=3e-2), "c mismatch"

    print("KERNEL_OK")
</pallas_src>

<mosaic_0001>
module attributes {stable_mosaic.version = 11 : i64} {
  func.func @_convlstm_kernel(%arg0: i32, %arg1: memref<1x48x456xbf16, #tpu.memory_space<vmem>>, %arg2: memref<1x32x384xf32, #tpu.memory_space<vmem>>, %arg3: memref<128x432xbf16, #tpu.memory_space<vmem>>, %arg4: memref<128x1xf32, #tpu.memory_space<vmem>>, %arg5: memref<3x32x1xf32, #tpu.memory_space<vmem>>, %arg6: memref<1x32x384xbf16, #tpu.memory_space<vmem>>, %arg7: memref<1x32x384xf32, #tpu.memory_space<vmem>>, %arg8: memref<432x384xbf16, #tpu.memory_space<vmem>>, %arg9: memref<128x384xf32, #tpu.memory_space<vmem>>) attributes {dimension_semantics = [#tpu.dimension_semantics<parallel>], iteration_bounds = array<i64: 2>, scalar_prefetch = 0 : i64, scratch_operands = 2 : i64, tpu.core_type = #tpu.core_type<tc>, window_params = [{transform_indices = @transform_0, window_bounds = array<i64: 1, 48, 456>}, {transform_indices = @transform_1, window_bounds = array<i64: 1, 32, 384>}, {pipeline_mode = #tpu.pipeline_mode<synchronous>, transform_indices = @transform_2, window_bounds = array<i64: 128, 432>}, {pipeline_mode = #tpu.pipeline_mode<synchronous>, transform_indices = @transform_3, window_bounds = array<i64: 128, 1>}, {pipeline_mode = #tpu.pipeline_mode<synchronous>, transform_indices = @transform_4, window_bounds = array<i64: 3, 32, 1>}, {transform_indices = @transform_5, window_bounds = array<i64: 1, 32, 384>}, {transform_indices = @transform_6, window_bounds = array<i64: 1, 32, 384>}]} {
    %c0 = arith.constant 0 : index
    %c0_0 = arith.constant 0 : index
    %c0_1 = arith.constant 0 : index
    %0 = vector.load %arg1[%c0, %c0_0, %c0_1] : memref<1x48x456xbf16, #tpu.memory_space<vmem>>, vector<1x48x456xbf16>
    %1 = vector.shape_cast %0 : vector<1x48x456xbf16> to vector<48x456xbf16>
    %2 = vector.extract_strided_slice %1 {offsets = [0, 0], sizes = [48, 384], strides = [1, 1]} : vector<48x456xbf16> to vector<48x384xbf16>
    %c0_2 = arith.constant 0 : index
    %c0_3 = arith.constant 0 : index
    %3 = vector.load %arg8[%c0_2, %c0_3] : memref<432x384xbf16, #tpu.memory_space<vmem>>, vector<48x384xbf16>
    tpu.vector_store %arg8[%c0_2, %c0_3], %2 {strides = array<i32>} : memref<432x384xbf16, #tpu.memory_space<vmem>>, vector<48x384xbf16>,
    %4 = vector.extract_strided_slice %1 {offsets = [0, 1], sizes = [48, 384], strides = [1, 1]} : vector<48x456xbf16> to vector<48x384xbf16>
    %c48 = arith.constant 48 : index
    %c0_4 = arith.constant 0 : index
    %5 = vector.load %arg8[%c48, %c0_4] : memref<432x384xbf16, #tpu.memory_space<vmem>>, vector<48x384xbf16>
    tpu.vector_store %arg8[%c48, %c0_4], %4 {strides = array<i32>} : memref<432x384xbf16, #tpu.memory_space<vmem>>, vector<48x384xbf16>,
    %6 = vector.extract_strided_slice %1 {offsets = [0, 2], sizes = [48, 384], strides = [1, 1]} : vector<48x456xbf16> to vector<48x384xbf16>
    %c96 = arith.constant 96 : index
    %c0_5 = arith.constant 0 : index
    %7 = vector.load %arg8[%c96, %c0_5] : memref<432x384xbf16, #tpu.memory_space<vmem>>, vector<48x384xbf16>
    tpu.vector_store %arg8[%c96, %c0_5], %6 {strides = array<i32>} : memref<432x384xbf16, #tpu.memory_space<vmem>>, vector<48x384xbf16>,
    %8 = vector.extract_strided_slice %1 {offsets = [0, 24], sizes = [48, 384], strides = [1, 1]} : vector<48x456xbf16> to vector<48x384xbf16>
    %c144 = arith.constant 144 : index
    %c0_6 = arith.constant 0 : index
    %9 = vector.load %arg8[%c144, %c0_6] : memref<432x384xbf16, #tpu.memory_space<vmem>>, vector<48x384xbf16>
    tpu.vector_store %arg8[%c144, %c0_6], %8 {strides = array<i32>} : memref<432x384xbf16, #tpu.memory_space<vmem>>, vector<48x384xbf16>,
    %10 = vector.extract_strided_slice %1 {offsets = [0, 25], sizes = [48, 384], strides = [1, 1]} : vector<48x456xbf16> to vector<48x384xbf16>
    %c192 = arith.constant 192 : index
    %c0_7 = arith.constant 0 : index
    %11 = vector.load %arg8[%c192, %c0_7] : memref<432x384xbf16, #tpu.memory_space<vmem>>, vector<48x384xbf16>
    tpu.vector_store %arg8[%c192, %c0_7], %10 {strides = array<i32>} : memref<432x384xbf16, #tpu.memory_space<vmem>>, vector<48x384xbf16>,
    %12 = vector.extract_strided_slice %1 {offsets = [0, 26], sizes = [48, 384], strides = [1, 1]} : vector<48x456xbf16> to vector<48x384xbf16>
    %c240 = arith.constant 240 : index
    %c0_8 = arith.constant 0 : index
    %13 = vector.load %arg8[%c240, %c0_8] : memref<432x384xbf16, #tpu.memory_space<vmem>>, vector<48x384xbf16>
    tpu.vector_store %arg8[%c240, %c0_8], %12 {strides = array<i32>} : memref<432x384xbf16, #tpu.memory_space<vmem>>, vector<48x384xbf16>,
    %14 = vector.extract_strided_slice %1 {offsets = [0, 48], sizes = [48, 384], strides = [1, 1]} : vector<48x456xbf16> to vector<48x384xbf16>
    %c288 = arith.constant 288 : index
    %c0_9 = arith.constant 0 : index
    %15 = vector.load %arg8[%c288, %c0_9] : memref<432x384xbf16, #tpu.memory_space<vmem>>, vector<48x384xbf16>
    tpu.vector_store %arg8[%c288, %c0_9], %14 {strides = array<i32>} : memref<432x384xbf16, #tpu.memory_space<vmem>>, vector<48x384xbf16>,
    %16 = vector.extract_strided_slice %1 {offsets = [0, 49], sizes = [48, 384], strides = [1, 1]} : vector<48x456xbf16> to vector<48x384xbf16>
    %c336 = arith.constant 336 : index
    %c0_10 = arith.constant 0 : index
    %17 = vector.load %arg8[%c336, %c0_10] : memref<432x384xbf16, #tpu.memory_space<vmem>>, vector<48x384xbf16>
    tpu.vector_store %arg8[%c336, %c0_10], %16 {strides = array<i32>} : memref<432x384xbf16, #tpu.memory_space<vmem>>, vector<48x384xbf16>,
    %18 = vector.extract_strided_slice %1 {offsets = [0, 50], sizes = [48, 384], strides = [1, 1]} : vector<48x456xbf16> to vector<48x384xbf16>
    %c384 = arith.constant 384 : index
    %c0_11 = arith.constant 0 : index
    %19 = vector.load %arg8[%c384, %c0_11] : memref<432x384xbf16, #tpu.memory_space<vmem>>, vector<48x384xbf16>
    tpu.vector_store %arg8[%c384, %c0_11], %18 {strides = array<i32>} : memref<432x384xbf16, #tpu.memory_space<vmem>>, vector<48x384xbf16>,
    %c0_12 = arith.constant 0 : index
    %c0_13 = arith.constant 0 : index
    %20 = vector.load %arg3[%c0_12, %c0_13] : memref<128x432xbf16, #tpu.memory_space<vmem>>, vector<128x432xbf16>
    %c0_14 = arith.constant 0 : index
    %c0_15 = arith.constant 0 : index
    %21 = vector.load %arg8[%c0_14, %c0_15] : memref<432x384xbf16, #tpu.memory_space<vmem>>, vector<432x384xbf16>
    %cst = arith.constant dense<0.000000e+00> : vector<128x384xf32>
    %22 = tpu.matmul %20, %21, %cst {dimension_numbers = #tpu.dot_dimension_numbers<[1], [0], [0], [1], [0, 0, 1, 1], [], []>} : vector<128x432xbf16>, vector<432x384xbf16>, vector<128x384xf32> -> vector<128x384xf32>
    %c0_16 = arith.constant 0 : index
    %c0_17 = arith.constant 0 : index
    %23 = vector.load %arg9[%c0_16, %c0_17] : memref<128x384xf32, #tpu.memory_space<vmem>>, vector<128x384xf32>
    tpu.vector_store %arg9[%c0_16, %c0_17], %22 {strides = array<i32>} : memref<128x384xf32, #tpu.memory_space<vmem>>, vector<128x384xf32>,
    %c0_18 = arith.constant 0 : index
    %c0_19 = arith.constant 0 : index
    %c0_20 = arith.constant 0 : index
    %24 = vector.load %arg2[%c0_18, %c0_19, %c0_20] : memref<1x32x384xf32, #tpu.memory_space<vmem>>, vector<1x32x384xf32>
    %25 = vector.shape_cast %24 : vector<1x32x384xf32> to vector<32x384xf32>
    %c0_21 = arith.constant 0 : index
    %c0_22 = arith.constant 0 : index
    %26 = vector.load %arg9[%c0_21, %c0_22] : memref<128x384xf32, #tpu.memory_space<vmem>>, vector<32x384xf32>
    %c0_23 = arith.constant 0 : index
    %c0_24 = arith.constant 0 : index
    %27 = vector.load %arg4[%c0_23, %c0_24] : memref<128x1xf32, #tpu.memory_space<vmem>>, vector<32x1xf32>
    %28 = vector.broadcast %27 : vector<32x1xf32> to vector<32x384xf32>
    %29 = arith.addf %26, %28 : vector<32x384xf32>
    %c0_25 = arith.constant 0 : index
    %c0_26 = arith.constant 0 : index
    %c0_27 = arith.constant 0 : index
    %30 = vector.load %arg5[%c0_25, %c0_26, %c0_27] : memref<3x32x1xf32, #tpu.memory_space<vmem>>, vector<1x32x1xf32>
    %31 = vector.shape_cast %30 : vector<1x32x1xf32> to vector<32x1xf32>
    %32 = vector.broadcast %31 : vector<32x1xf32> to vector<32x384xf32>
    %33 = arith.mulf %32, %25 : vector<32x384xf32>
    %34 = arith.addf %29, %33 : vector<32x384xf32>
    %cst_28 = arith.constant 5.000000e-01 : f32
    %35 = vector.broadcast %cst_28 : f32 to vector<32x384xf32>
    %36 = arith.mulf %35, %34 : vector<32x384xf32>
    %37 = math.tanh %36 : vector<32x384xf32>
    %cst_29 = arith.constant 5.000000e-01 : f32
    %38 = vector.broadcast %cst_29 : f32 to vector<32x384xf32>
    %39 = arith.mulf %38, %37 : vector<32x384xf32>
    %cst_30 = arith.constant 5.000000e-01 : f32
    %40 = vector.broadcast %cst_30 : f32 to vector<32x384xf32>
    %41 = arith.addf %39, %40 : vector<32x384xf32>
    %c32 = arith.constant 32 : index
    %c0_31 = arith.constant 0 : index
    %42 = vector.load %arg9[%c32, %c0_31] : memref<128x384xf32, #tpu.memory_space<vmem>>, vector<32x384xf32>
    %c32_32 = arith.constant 32 : index
    %c0_33 = arith.constant 0 : index
    %43 = vector.load %arg4[%c32_32, %c0_33] : memref<128x1xf32, #tpu.memory_space<vmem>>, vector<32x1xf32>
    %44 = vector.broadcast %43 : vector<32x1xf32> to vector<32x384xf32>
    %45 = arith.addf %42, %44 : vector<32x384xf32>
    %c1 = arith.constant 1 : index
    %c0_34 = arith.constant 0 : index
    %c0_35 = arith.constant 0 : index
    %46 = vector.load %arg5[%c1, %c0_34, %c0_35] : memref<3x32x1xf32, #tpu.memory_space<vmem>>, vector<1x32x1xf32>
    %47 = vector.shape_cast %46 : vector<1x32x1xf32> to vector<32x1xf32>
    %48 = vector.broadcast %47 : vector<32x1xf32> to vector<32x384xf32>
    %49 = arith.mulf %48, %25 : vector<32x384xf32>
    %50 = arith.addf %45, %49 : vector<32x384xf32>
    %cst_36 = arith.constant 5.000000e-01 : f32
    %51 = vector.broadcast %cst_36 : f32 to vector<32x384xf32>
    %52 = arith.mulf %51, %50 : vector<32x384xf32>
    %53 = math.tanh %52 : vector<32x384xf32>
    %cst_37 = arith.constant 5.000000e-01 : f32
    %54 = vector.broadcast %cst_37 : f32 to vector<32x384xf32>
    %55 = arith.mulf %54, %53 : vector<32x384xf32>
    %cst_38 = arith.constant 5.000000e-01 : f32
    %56 = vector.broadcast %cst_38 : f32 to vector<32x384xf32>
    %57 = arith.addf %55, %56 : vector<32x384xf32>
    %c64 = arith.constant 64 : index
    %c0_39 = arith.constant 0 : index
    %58 = vector.load %arg9[%c64, %c0_39] : memref<128x384xf32, #tpu.memory_space<vmem>>, vector<32x384xf32>
    %c64_40 = arith.constant 64 : index
    %c0_41 = arith.constant 0 : index
    %59 = vector.load %arg4[%c64_40, %c0_41] : memref<128x1xf32, #tpu.memory_space<vmem>>, vector<32x1xf32>
    %60 = vector.broadcast %59 : vector<32x1xf32> to vector<32x384xf32>
    %61 = arith.addf %58, %60 : vector<32x384xf32>
    %62 = math.tanh %61 : vector<32x384xf32>
    %63 = arith.mulf %57, %25 : vector<32x384xf32>
    %64 = arith.mulf %41, %62 : vector<32x384xf32>
    %65 = arith.addf %63, %64 : vector<32x384xf32>
    %c96_42 = arith.constant 96 : index
    %c0_43 = arith.constant 0 : index
    %66 = vector.load %arg9[%c96_42, %c0_43] : memref<128x384xf32, #tpu.memory_space<vmem>>, vector<32x384xf32>
    %c96_44 = arith.constant 96 : index
    %c0_45 = arith.constant 0 : index
    %67 = vector.load %arg4[%c96_44, %c0_45] : memref<128x1xf32, #tpu.memory_space<vmem>>, vector<32x1xf32>
    %68 = vector.broadcast %67 : vector<32x1xf32> to vector<32x384xf32>
    %69 = arith.addf %66, %68 : vector<32x384xf32>
    %c2 = arith.constant 2 : index
    %c0_46 = arith.constant 0 : index
    %c0_47 = arith.constant 0 : index
    %70 = vector.load %arg5[%c2, %c0_46, %c0_47] : memref<3x32x1xf32, #tpu.memory_space<vmem>>, vector<1x32x1xf32>
    %71 = vector.shape_cast %70 : vector<1x32x1xf32> to vector<32x1xf32>
    %72 = vector.broadcast %71 : vector<32x1xf32> to vector<32x384xf32>
    %73 = arith.mulf %72, %65 : vector<32x384xf32>
    %74 = arith.addf %69, %73 : vector<32x384xf32>
    %cst_48 = arith.constant 5.000000e-01 : f32
    %75 = vector.broadcast %cst_48 : f32 to vector<32x384xf32>
    %76 = arith.mulf %75, %74 : vector<32x384xf32>
    %77 = math.tanh %76 : vector<32x384xf32>
    %cst_49 = arith.constant 5.000000e-01 : f32
    %78 = vector.broadcast %cst_49 : f32 to vector<32x384xf32>
    %79 = arith.mulf %78, %77 : vector<32x384xf32>
    %cst_50 = arith.constant 5.000000e-01 : f32
    %80 = vector.broadcast %cst_50 : f32 to vector<32x384xf32>
    %81 = arith.addf %79, %80 : vector<32x384xf32>
    %82 = math.tanh %65 : vector<32x384xf32>
    %83 = arith.mulf %81, %82 : vector<32x384xf32>
    %84 = arith.truncf %83 : vector<32x384xf32> to vector<32x384xbf16>
    %c0_51 = arith.constant 0 : index
    %c0_52 = arith.constant 0 : index
    %c0_53 = arith.constant 0 : index
    %85 = vector.load %arg6[%c0_51, %c0_52, %c0_53] : memref<1x32x384xbf16, #tpu.memory_space<vmem>>, vector<1x32x384xbf16>
    %86 = vector.shape_cast %85 : vector<1x32x384xbf16> to vector<32x384xbf16>
    %87 = vector.shape_cast %84 : vector<32x384xbf16> to vector<1x32x384xbf16>
    tpu.vector_store %arg6[%c0_51, %c0_52, %c0_53], %87 {strides = array<i32>} : memref<1x32x384xbf16, #tpu.memory_space<vmem>>, vector<1x32x384xbf16>,
    %c0_54 = arith.constant 0 : index
    %c0_55 = arith.constant 0 : index
    %c0_56 = arith.constant 0 : index
    %88 = vector.load %arg7[%c0_54, %c0_55, %c0_56] : memref<1x32x384xf32, #tpu.memory_space<vmem>>, vector<1x32x384xf32>
    %89 = vector.shape_cast %88 : vector<1x32x384xf32> to vector<32x384xf32>
    %90 = vector.shape_cast %65 : vector<32x384xf32> to vector<1x32x384xf32>
    tpu.vector_store %arg7[%c0_54, %c0_55, %c0_56], %90 {strides = array<i32>} : memref<1x32x384xf32, #tpu.memory_space<vmem>>, vector<1x32x384xf32>,
    return
  }
  func.func @transform_0(%arg0: i32) -> (i32, i32, i32) {
    %c0_i32 = arith.constant 0 : i32
    %c0_i32_0 = arith.constant 0 : i32
    %c0_i32_1 = arith.constant 0 : i32
    return %arg0, %c0_i32, %c0_i32_0 : i32, i32, i32
  }
  func.func @transform_1(%arg0: i32) -> (i32, i32, i32) {
    %c0_i32 = arith.constant 0 : i32
    %c0_i32_0 = arith.constant 0 : i32
    %c0_i32_1 = arith.constant 0 : i32
    return %arg0, %c0_i32, %c0_i32_0 : i32, i32, i32
  }
  func.func @transform_2(%arg0: i32) -> (i32, i32) {
    %c0_i32 = arith.constant 0 : i32
    %c0_i32_0 = arith.constant 0 : i32
    %c0_i32_1 = arith.constant 0 : i32
    return %c0_i32, %c0_i32_0 : i32, i32
  }
  func.func @transform_3(%arg0: i32) -> (i32, i32) {
    %c0_i32 = arith.constant 0 : i32
    %c0_i32_0 = arith.constant 0 : i32
    %c0_i32_1 = arith.constant 0 : i32
    return %c0_i32, %c0_i32_0 : i32, i32
  }
  func.func @transform_4(%arg0: i32) -> (i32, i32, i32) {
    %c0_i32 = arith.constant 0 : i32
    %c0_i32_0 = arith.constant 0 : i32
    %c0_i32_1 = arith.constant 0 : i32
    %c0_i32_2 = arith.constant 0 : i32
    return %c0_i32, %c0_i32_0, %c0_i32_1 : i32, i32, i32
  }
  func.func @transform_5(%arg0: i32) -> (i32, i32, i32) {
    %c0_i32 = arith.constant 0 : i32
    %c0_i32_0 = arith.constant 0 : i32
    %c0_i32_1 = arith.constant 0 : i32
    return %arg0, %c0_i32, %c0_i32_0 : i32, i32, i32
  }
  func.func @transform_6(%arg0: i32) -> (i32, i32, i32) {
    %c0_i32 = arith.constant 0 : i32
    %c0_i32_0 = arith.constant 0 : i32
    %c0_i32_1 = arith.constant 0 : i32
    return %arg0, %c0_i32, %c0_i32_0 : i32, i32, i32
  }
}

</mosaic_0001>

<llo_original>
// kernel: _lambda_.1
$region0: #{_lambda_.1}
  #allocation0 [shape = 'u32[]', space=smem, size = 0x4, offset = 0x4, fixed_abs, tag = 'smem constant byte address 0x4 - core index']
  #allocation1 [shape = 'u32[144,128]{1,0:T(1,128)}', space=vmem, size = 0x12000, scoped, tag = 'internal scratch']
  #allocation2 [shape = 'bf16[432,384]{1,0:T(16,128)(2,1)}', space=vmem, size = 0x51000, scoped, tag = 'scratch operand']
  #allocation3 [shape = 'f32[128,384]{1,0:T(8,128)}', space=vmem, size = 0x30000, scoped, tag = 'scratch operand']
  %s0 = inlined_call_operand.vmem [shape: bf16[2,48,456], index: 0, kind: input, shape index: {}]
  %s1 = inlined_call_operand.vmem [shape: f32[2,32,384], index: 1, kind: input, shape index: {}]
  %s2 = inlined_call_operand.vmem [shape: bf16[128,432], index: 2, kind: input, shape index: {}]
  %s3 = inlined_call_operand.vmem [shape: f32[128,1], index: 3, kind: input, shape index: {}]
  %s4 = inlined_call_operand.vmem [shape: f32[3,32,1], index: 4, kind: input, shape index: {}]
  %s5 = inlined_call_operand.vmem [shape: bf16[2,32,384], index: 5, kind: output, shape index: {0}]
  %s6 = inlined_call_operand.vmem [shape: f32[2,32,384], index: 6, kind: output, shape index: {1}]
  %7 = xla_tuple %s5, %s6
  %s8 = sld [smem:[#allocation0]]
  $region61: #{_lambda_.1} parent=0
    _
  %s10 = ssub.s32 1, %s8
  %s11 = scalar_select 0, %s10, %s8
  loop: start=0, step=1, limit=4
  $region2: #{_lambda_.1} parent=0 // loop_pre_header
    _
  $region3: #{_lambda_.1} parent=0 // loop_header
    %s13 = sphi 0, %s17
    %p14 = scmp.ge.s32.totalorder %s13, 4
    %s23 = sphi 0, %s25
    %s26 = sphi 0, %s23
    %s27 = sphi 0, %s26
    %s43 = sphi 0, %s27
    %s49 = sphi 0, %s51
    %s52 = sphi 0, %s49
    %s53 = sphi 0, %s52
    %s69 = sphi 0, %s53
    %s73 = sphi 0, %s73
    %s75 = sphi 0, %s73
    %s76 = sphi 0, %s75
    %s90 = sphi 0, %s76
    %s94 = sphi 0, %s94
    %s96 = sphi 0, %s94
    %s97 = sphi 0, %s96
    %s111 = sphi 0, %s97
    %s115 = sphi 0, %s115
    %s117 = sphi 0, %s115
    %s118 = sphi 0, %s117
    %s132 = sphi 0, %s118
    %s138 = sphi 0, %s140
    %s141 = sphi 0, %s138
    %s142 = sphi 0, %s141
    %s158 = sphi 0, %s142
    %s164 = sphi 0, %s166
    %s167 = sphi 0, %s164
    %s168 = sphi 0, %s167
    %s184 = sphi 0, %s168
  $region4: #{_lambda_.1} parent=0 // loop_header_branch
    %16 = sbr.rel (%p14) target = $region8
  $region5: #{_lambda_.1} parent=0 // loop_body
    %s18 = ssub.s32 %s13, 1
    %s19 = ssub.s32 %s13, 2
    %s20 = sadd.s32 %s13, 1
    %s21 = ssub.s32 %s13, %s20
    %p22 = scmp.eq.s32.totalorder %s21, 0
    %s24 = sadd.s32 %s23, 1
    %s25 = scalar_select %p22, %s23, %s24
    %p28 = pneg %p22
    %p29 = scmp.eq.s32.totalorder %s13, 1
    %p30 = por %p28, %p29
    %p31 = scmp.ne.s32.totalorder %s23, %s26
    %p32 = scmp.eq.s32.totalorder %s13, 0
    %p33 = por %p31, %p32
    %p34 = scmp.ne.s32.totalorder %s23, %s26
    %p35 = scmp.eq.s32.totalorder %s18, 1
    %p36 = por %p34, %p35
    %p37 = scmp.ne.s32.totalorder %s26, %s27
    %p38 = scmp.eq.s32.totalorder %s18, 0
    %p39 = por %p37, %p38
    %p40 = scmp.ne.s32.totalorder %s26, %s27
    %p41 = scmp.eq.s32.totalorder %s19, 1
    %p42 = por %p40, %p41
    %p44 = scmp.ne.s32.totalorder %s27, %s43
    %p45 = scmp.eq.s32.totalorder %s19, 0
    %p46 = por %p44, %p45
    %s47 = ssub.s32 %s13, %s20
    %p48 = scmp.eq.s32.totalorder %s47, 0
    %s50 = sadd.s32 %s49, 1
    %s51 = scalar_select %p48, %s49, %s50
    %p54 = pneg %p48
    %p55 = scmp.eq.s32.totalorder %s13, 1
    %p56 = por %p54, %p55
    %p57 = scmp.ne.s32.totalorder %s49, %s52
    %p58 = scmp.eq.s32.totalorder %s13, 0
    %p59 = por %p57, %p58
    %p60 = scmp.ne.s32.totalorder %s49, %s52
    %p61 = scmp.eq.s32.totalorder %s18, 1
    %p62 = por %p60, %p61
    %p63 = scmp.ne.s32.totalorder %s52, %s53
    %p64 = scmp.eq.s32.totalorder %s18, 0
    %p65 = por %p63, %p64
    %p66 = scmp.ne.s32.totalorder %s52, %s53
    %p67 = scmp.eq.s32.totalorder %s19, 1
    %p68 = por %p66, %p67
    %p70 = scmp.ne.s32.totalorder %s53, %s69
    %p71 = scmp.eq.s32.totalorder %s19, 0
    %p72 = por %p70, %p71
    %s74 = sadd.s32 %s73, 1
    %p77 = scmp.eq.s32.totalorder %s13, 1
    %p78 = scmp.ne.s32.totalorder %s73, %s75
    %p79 = scmp.eq.s32.totalorder %s13, 0
    %p80 = por %p78, %p79
    %p81 = scmp.ne.s32.totalorder %s73, %s75
    %p82 = scmp.eq.s32.totalorder %s18, 1
    %p83 = por %p81, %p82
    %p84 = scmp.ne.s32.totalorder %s75, %s76
    %p85 = scmp.eq.s32.totalorder %s18, 0
    %p86 = por %p84, %p85
    %p87 = scmp.ne.s32.totalorder %s75, %s76
    %p88 = scmp.eq.s32.totalorder %s19, 1
    %p89 = por %p87, %p88
    %p91 = scmp.ne.s32.totalorder %s76, %s90
    %p92 = scmp.eq.s32.totalorder %s19, 0
    %p93 = por %p91, %p92
    %s95 = sadd.s32 %s94, 1
    %p98 = scmp.eq.s32.totalorder %s13, 1
    %p99 = scmp.ne.s32.totalorder %s94, %s96
    %p100 = scmp.eq.s32.totalorder %s13, 0
    %p101 = por %p99, %p100
    %p102 = scmp.ne.s32.totalorder %s94, %s96
    %p103 = scmp.eq.s32.totalorder %s18, 1
    %p104 = por %p102, %p103
    %p105 = scmp.ne.s32.totalorder %s96, %s97
    %p106 = scmp.eq.s32.totalorder %s18, 0
    %p107 = por %p105, %p106
    %p108 = scmp.ne.s32.totalorder %s96, %s97
    %p109 = scmp.eq.s32.totalorder %s19, 1
    %p110 = por %p108, %p109
    %p112 = scmp.ne.s32.totalorder %s97, %s111
    %p113 = scmp.eq.s32.totalorder %s19, 0
    %p114 = por %p112, %p113
    %s116 = sadd.s32 %s115, 1
    %p119 = scmp.eq.s32.totalorder %s13, 1
    %p120 = scmp.ne.s32.totalorder %s115, %s117
    %p121 = scmp.eq.s32.totalorder %s13, 0
    %p122 = por %p120, %p121
    %p123 = scmp.ne.s32.totalorder %s115, %s117
    %p124 = scmp.eq.s32.totalorder %s18, 1
    %p125 = por %p123, %p124
    %p126 = scmp.ne.s32.totalorder %s117, %s118
    %p127 = scmp.eq.s32.totalorder %s18, 0
    %p128 = por %p126, %p127
    %p129 = scmp.ne.s32.totalorder %s117, %s118
    %p130 = scmp.eq.s32.totalorder %s19, 1
    %p131 = por %p129, %p130
    %p133 = scmp.ne.s32.totalorder %s118, %s132
    %p134 = scmp.eq.s32.totalorder %s19, 0
    %p135 = por %p133, %p134
    %s136 = ssub.s32 %s13, %s20
    %p137 = scmp.eq.s32.totalorder %s136, 0
    %s139 = sadd.s32 %s138, 1
    %s140 = scalar_select %p137, %s138, %s139
    %p143 = pneg %p137
    %p144 = scmp.eq.s32.totalorder %s13, 1
    %p145 = por %p143, %p144
    %p146 = scmp.ne.s32.totalorder %s138, %s141
    %p147 = scmp.eq.s32.totalorder %s13, 0
    %p148 = por %p146, %p147
    %p149 = scmp.ne.s32.totalorder %s138, %s141
    %p150 = scmp.eq.s32.totalorder %s18, 1
    %p151 = por %p149, %p150
    %p152 = scmp.ne.s32.totalorder %s141, %s142
    %p153 = scmp.eq.s32.totalorder %s18, 0
    %p154 = por %p152, %p153
    %p155 = scmp.ne.s32.totalorder %s141, %s142
    %p156 = scmp.eq.s32.totalorder %s19, 1
    %p157 = por %p155, %p156
    %p159 = scmp.ne.s32.totalorder %s142, %s158
    %p160 = scmp.eq.s32.totalorder %s19, 0
    %p161 = por %p159, %p160
    %s162 = ssub.s32 %s13, %s20
    %p163 = scmp.eq.s32.totalorder %s162, 0
    %s165 = sadd.s32 %s164, 1
    %s166 = scalar_select %p163, %s164, %s165
    %p169 = pneg %p163
    %p170 = scmp.eq.s32.totalorder %s13, 1
    %p171 = por %p169, %p170
    %p172 = scmp.ne.s32.totalorder %s164, %s167
    %p173 = scmp.eq.s32.totalorder %s13, 0
    %p174 = por %p172, %p173
    %p175 = scmp.ne.s32.totalorder %s164, %s167
    %p176 = scmp.eq.s32.totalorder %s18, 1
    %p177 = por %p175, %p176
    %p178 = scmp.ne.s32.totalorder %s167, %s168
    %p179 = scmp.eq.s32.totalorder %s18, 0
    %p180 = por %p178, %p179
    %p181 = scmp.ne.s32.totalorder %s167, %s168
    %p182 = scmp.eq.s32.totalorder %s19, 1
    %p183 = por %p181, %p182
    %p185 = scmp.ne.s32.totalorder %s168, %s184
    %p186 = scmp.eq.s32.totalorder %s19, 0
    %p187 = por %p185, %p186
    %p188 = scmp.le.s32.totalorder 1, %s13
    %p189 = scmp.lt.s32.totalorder %s13, 3
    %p190 = pnand %p188, %p189
    %p191 = pneg %p190
    // Predicated region
    $region9: #{_lambda_.1} parent=5 // pred_check
      _
    $region10: #{_lambda_.1} parent=5 // pred_check_branch
      %193 = sbr.rel (%p190) target = $region12
    $region11: #{_lambda_.1} parent=5 // pred_region
      %s194 = ssub.s32 %s13, 1
      // Predicated region
      $region13: #{_lambda_.1} parent=11 // pred_check
        %p195 = pneg %p86
      $region14: #{_lambda_.1} parent=11 // pred_check_branch
        %197 = sbr.rel (%p195) target = $region16
      $region15: #{_lambda_.1} parent=11 // pred_region
        _
      $region16: #{_lambda_.1} parent=11 // pred_fallthru
        _
      // Predicated region
      $region17: #{_lambda_.1} parent=11 // pred_check
        %p198 = pneg %p107
      $region18: #{_lambda_.1} parent=11 // pred_check_branch
        %200 = sbr.rel (%p198) target = $region20
      $region19: #{_lambda_.1} parent=11 // pred_region
        _
      $region20: #{_lambda_.1} parent=11 // pred_fallthru
        _
      // Predicated region
      $region21: #{_lambda_.1} parent=11 // pred_check
        %p201 = pneg %p128
      $region22: #{_lambda_.1} parent=11 // pred_check_branch
        %203 = sbr.rel (%p201) target = $region24
      $region23: #{_lambda_.1} parent=11 // pred_region
        _
      $region24: #{_lambda_.1} parent=11 // pred_fallthru
        _
    $region12: #{_lambda_.1} parent=5 // pred_fallthru
      _
    %p204 = scmp.lt.s32.totalorder %s13, 2
    // Predicated region
    $region25: #{_lambda_.1} parent=5 // pred_check
      %p205 = pneg %p204
    $region26: #{_lambda_.1} parent=5 // pred_check_branch
      %207 = sbr.rel (%p205) target = $region28
    $region27: #{_lambda_.1} parent=5 // pred_region
      // Predicated region
      $region29: #{_lambda_.1} parent=27 // pred_check
        %p208 = pneg %p33
      $region30: #{_lambda_.1} parent=27 // pred_check_branch
        %210 = sbr.rel (%p208) target = $region32
      $region31: #{_lambda_.1} parent=27 // pred_region
        %p211 = scmp.lt.s32.totalorder %s13, 1
        %s212 = scalar_select %p211, %s13, 1
        %s213 = smul.addr %s212, 24
        %s214 = smul.addr %s213, 4
        %s215 = scalar_lea.vmem %s0, %s214
      $region32: #{_lambda_.1} parent=27 // pred_fallthru
        _
      // Predicated region
      $region33: #{_lambda_.1} parent=27 // pred_check
        %p216 = pneg %p59
      $region34: #{_lambda_.1} parent=27 // pred_check_branch
        %218 = sbr.rel (%p216) target = $region36
      $region35: #{_lambda_.1} parent=27 // pred_region
        %p219 = scmp.lt.s32.totalorder %s13, 1
        %s220 = scalar_select %p219, %s13, 1
        %s221 = smul.addr %s220, 12
        %s222 = smul.addr %s221, 8
        %s223 = scalar_lea.vmem %s1, %s222
      $region36: #{_lambda_.1} parent=27 // pred_fallthru
        _
    $region28: #{_lambda_.1} parent=5 // pred_fallthru
      _
    %p224 = scmp.le.s32.totalorder 1, %s13
    %p225 = scmp.lt.s32.totalorder %s13, 3
    %p226 = pnand %p224, %p225
    %p227 = pneg %p226
    // Predicated region
    $region37: #{_lambda_.1} parent=5 // pred_check
      _
    $region38: #{_lambda_.1} parent=5 // pred_check_branch
      %229 = sbr.rel (%p226) target = $region40
    $region39: #{_lambda_.1} parent=5 // pred_region
      %s230 = ssub.s32 %s13, 1
      %p231 = scmp.lt.s32.totalorder %s18, 1
      %s232 = scalar_select %p231, %s18, 1
      %s233 = smul.addr %s232, 24
      %s234 = smul.addr %s233, 4
      %s235 = scalar_lea.vmem %s0, %s234
      %p236 = pneg %p39
      %p237 = pneg %p36
      %p238 = scmp.lt.s32.totalorder %s18, 1
      %s239 = scalar_select %p238, %s18, 1
      %s240 = smul.addr %s239, 12
      %s241 = smul.addr %s240, 8
      %s242 = scalar_lea.vmem %s1, %s241
      %p243 = pneg %p65
      %p244 = pneg %p62
      %p245 = pneg %p86
      %p246 = pneg %p83
      %p247 = pneg %p107
      %p248 = pneg %p104
      %p249 = pneg %p128
      %p250 = pneg %p125
      %p251 = pneg %p154
      %p252 = pneg %p151
      %p253 = scmp.lt.s32.totalorder %s18, 1
      %s254 = scalar_select %p253, %s18, 1
      %s255 = smul.addr %s254, 12
      %s256 = smul.addr %s255, 4
      %s257 = scalar_lea.vmem %s5, %s256
      %p258 = pneg %p180
      %p259 = pneg %p177
      %p260 = scmp.lt.s32.totalorder %s18, 1
      %s261 = scalar_select %p260, %s18, 1
      %s262 = smul.addr %s261, 12
      %s263 = smul.addr %s262, 8
      %s264 = scalar_lea.vmem %s6, %s263
      %p265 = scmp.lt.s32.totalorder %s18, 1
      %s266 = scalar_select %p265, %s18, 1
      %s267 = smul.addr %s266, 24
      %s268 = smul.addr %s267, 4
      %s269 = scalar_lea.vmem %s0, %s268
      %p270 = scmp.lt.s32.totalorder %s18, 1
      %s271 = scalar_select %p270, %s18, 1
      %s272 = smul.addr %s271, 12
      %s273 = smul.addr %s272, 8
      %s274 = scalar_lea.vmem %s1, %s273
      %p275 = scmp.lt.s32.totalorder %s18, 1
      %s276 = scalar_select %p275, %s18, 1
      %s277 = smul.addr %s276, 12
      %s278 = smul.addr %s277, 4
      %s279 = scalar_lea.vmem %s5, %s278
      %p280 = scmp.lt.s32.totalorder %s18, 1
      %s281 = scalar_select %p280, %s18, 1
      %s282 = smul.addr %s281, 12
      %s283 = smul.addr %s282, 8
      %s284 = scalar_lea.vmem %s6, %s283
      %v286 = vld [vmem:[%s269] sm:$0xff]
      %v287 = vld [vmem:[%s269 + $0x8] sm:$0xff]
      %v288 = vld [vmem:[%s269 + $0x10] sm:$0xff]
      %v289 = vld [vmem:[%s269 + $0x18] sm:$0xff]
      %v290 = vld [vmem:[%s269 + $0x20] sm:$0xff]
      %v291 = vld [vmem:[%s269 + $0x28] sm:$0xff]
      %v292 = vld [vmem:[%s269 + $0x30] sm:$0xff]
      %v293 = vld [vmem:[%s269 + $0x38] sm:$0xff]
      %v294 = vld [vmem:[%s269 + $0x40] sm:$0xff]
      %v295 = vld [vmem:[%s269 + $0x48] sm:$0xff]
      %v296 = vld [vmem:[%s269 + $0x50] sm:$0xff]
      %v297 = vld [vmem:[%s269 + $0x58] sm:$0xff]
      %v310 = vunpack.c.l.b16 %v286
      %v311 = vunpack.c.h.b16 %v286
      %v312 = vunpack.c.l.b16 %v287
      %v313 = vunpack.c.l.b16 %v288
      %v314 = vunpack.c.h.b16 %v288
      %v315 = vunpack.c.l.b16 %v289
      %v316 = vunpack.c.l.b16 %v290
      %v317 = vunpack.c.h.b16 %v290
      %v318 = vunpack.c.l.b16 %v291
      %v319 = vunpack.c.l.b16 %v292
      %v320 = vunpack.c.h.b16 %v292
      %v321 = vunpack.c.l.b16 %v293
      %v322 = vunpack.c.l.b16 %v294
      %v323 = vunpack.c.h.b16 %v294
      %v324 = vunpack.c.l.b16 %v295
      %v325 = vunpack.c.l.b16 %v296
      %v326 = vunpack.c.h.b16 %v296
      %v327 = vunpack.c.l.b16 %v297
      %v328 = vpack.c.b16 %v313, %v310
      %v329 = vpack.c.b16 %v314, %v311
      %v330 = vpack.c.b16 %v315, %v312
      %v331 = vpack.c.b16 %v319, %v316
      %v332 = vpack.c.b16 %v320, %v317
      %v333 = vpack.c.b16 %v321, %v318
      %v334 = vpack.c.b16 %v325, %v322
      %v335 = vpack.c.b16 %v326, %v323
      %v336 = vpack.c.b16 %v327, %v324
      %346 = vst [vmem:[#allocation2] sm:$0xff] %v328
      %347 = vst [vmem:[#allocation2 + $0x8] sm:$0xff] %v329
      %348 = vst [vmem:[#allocation2 + $0x10] sm:$0xff] %v330
      %349 = vst [vmem:[#allocation2 + $0x18] sm:$0xff] %v331
      %350 = vst [vmem:[#allocation2 + $0x20] sm:$0xff] %v332
      %351 = vst [vmem:[#allocation2 + $0x28] sm:$0xff] %v333
      %352 = vst [vmem:[#allocation2 + $0x30] sm:$0xff] %v334
      %353 = vst [vmem:[#allocation2 + $0x38] sm:$0xff] %v335
      %354 = vst [vmem:[#allocation2 + $0x40] sm:$0xff] %v336
      %v355 = vunpack.c.h.b16 %v287
      %v356 = vunpack.c.h.b16 %v289
      %v357 = vunpack.c.h.b16 %v291
      %v358 = vunpack.c.h.b16 %v293
      %v359 = vunpack.c.h.b16 %v295
      %v360 = vunpack.c.h.b16 %v297
      %v361 = vpack.c.b16 %v356, %v355
      %v362 = vpack.c.b16 %v358, %v357
      %v363 = vpack.c.b16 %v360, %v359
      %364 = vrot.lane.b32.xlu0 %v328, 127
      %v365 = vpop.permute.xlu0 %364
      %366 = vrot.lane.b32.xlu0 %v329, 127
      %v367 = vpop.permute.xlu0 %366
      %368 = vrot.lane.b32.xlu0 %v330, 127
      %v369 = vpop.permute.xlu0 %368
      %370 = vrot.lane.b32.xlu0 %v361, 127
      %v371 = vpop.permute.xlu0 %370
      %372 = vrot.lane.b32.xlu0 %v331, 127
      %v373 = vpop.permute.xlu0 %372
      %374 = vrot.lane.b32.xlu0 %v332, 127
      %v375 = vpop.permute.xlu0 %374
      %376 = vrot.lane.b32.xlu0 %v333, 127
      %v377 = vpop.permute.xlu0 %376
      %378 = vrot.lane.b32.xlu0 %v362, 127
      %v379 = vpop.permute.xlu0 %378
      %380 = vrot.lane.b32.xlu0 %v334, 127
      %v381 = vpop.permute.xlu0 %380
      %382 = vrot.lane.b32.xlu0 %v335, 127
      %v383 = vpop.permute.xlu0 %382
      %384 = vrot.lane.b32.xlu0 %v336, 127
      %v385 = vpop.permute.xlu0 %384
      %386 = vrot.lane.b32.xlu0 %v363, 127
      %v387 = vpop.permute.xlu0 %386
      %vm388 = vcmask 1039360
      %v389 = vsel %vm388, %v365, %v367
      %v390 = vsel %vm388, %v367, %v369
      %v391 = vsel %vm388, %v369, %v371
      %v392 = vsel %vm388, %v373, %v375
      %v393 = vsel %vm388, %v375, %v377
      %v394 = vsel %vm388, %v377, %v379
      %v395 = vsel %vm388, %v381, %v383
      %v396 = vsel %vm388, %v383, %v385
      %v397 = vsel %vm388, %v385, %v387
      %407 = vst [vmem:[#allocation2 + $0x48] sm:$0xff] %v389
      %408 = vst [vmem:[#allocation2 + $0x50] sm:$0xff] %v390
      %409 = vst [vmem:[#allocation2 + $0x58] sm:$0xff] %v391
      %410 = vst [vmem:[#allocation2 + $0x60] sm:$0xff] %v392
      %411 = vst [vmem:[#allocation2 + $0x68] sm:$0xff] %v393
      %412 = vst [vmem:[#allocation2 + $0x70] sm:$0xff] %v394
      %413 = vst [vmem:[#allocation2 + $0x78] sm:$0xff] %v395
      %414 = vst [vmem:[#allocation2 + $0x80] sm:$0xff] %v396
      %415 = vst [vmem:[#allocation2 + $0x88] sm:$0xff] %v397
      %416 = vrot.lane.b32.xlu0 %v328, 126
      %v417 = vpop.permute.xlu0 %416
      %418 = vrot.lane.b32.xlu0 %v329, 126
      %v419 = vpop.permute.xlu0 %418
      %420 = vrot.lane.b32.xlu0 %v330, 126
      %v421 = vpop.permute.xlu0 %420
      %422 = vrot.lane.b32.xlu0 %v361, 126
      %v423 = vpop.permute.xlu0 %422
      %424 = vrot.lane.b32.xlu0 %v331, 126
      %v425 = vpop.permute.xlu0 %424
      %426 = vrot.lane.b32.xlu0 %v332, 126
      %v427 = vpop.permute.xlu0 %426
      %428 = vrot.lane.b32.xlu0 %v333, 126
      %v429 = vpop.permute.xlu0 %428
      %430 = vrot.lane.b32.xlu0 %v362, 126
      %v431 = vpop.permute.xlu0 %430
      %432 = vrot.lane.b32.xlu0 %v334, 126
      %v433 = vpop.permute.xlu0 %432
      %434 = vrot.lane.b32.xlu0 %v335, 126
      %v435 = vpop.permute.xlu0 %434
      %436 = vrot.lane.b32.xlu0 %v336, 126
      %v437 = vpop.permute.xlu0 %436
      %438 = vrot.lane.b32.xlu0 %v363, 126
      %v439 = vpop.permute.xlu0 %438
      %vm440 = vcmask 1031168
      %v441 = vsel %vm440, %v417, %v419
      %v442 = vsel %vm440, %v419, %v421
      %v443 = vsel %vm440, %v421, %v423
      %v444 = vsel %vm440, %v425, %v427
      %v445 = vsel %vm440, %v427, %v429
      %v446 = vsel %vm440, %v429, %v431
      %v447 = vsel %vm440, %v433, %v435
      %v448 = vsel %vm440, %v435, %v437
      %v449 = vsel %vm440, %v437, %v439
      %459 = vst [vmem:[#allocation2 + $0x90] sm:$0xff] %v441
      %460 = vst [vmem:[#allocation2 + $0x98] sm:$0xff] %v442
      %461 = vst [vmem:[#allocation2 + $0xa0] sm:$0xff] %v443
      %462 = vst [vmem:[#allocation2 + $0xa8] sm:$0xff] %v444
      %463 = vst [vmem:[#allocation2 + $0xb0] sm:$0xff] %v445
      %464 = vst [vmem:[#allocation2 + $0xb8] sm:$0xff] %v446
      %465 = vst [vmem:[#allocation2 + $0xc0] sm:$0xff] %v447
      %466 = vst [vmem:[#allocation2 + $0xc8] sm:$0xff] %v448
      %467 = vst [vmem:[#allocation2 + $0xd0] sm:$0xff] %v449
      %468 = vrot.lane.b32.xlu0 %v328, 104
      %v469 = vpop.permute.xlu0 %468
      %470 = vrot.lane.b32.xlu0 %v329, 104
      %v471 = vpop.permute.xlu0 %470
      %472 = vrot.lane.b32.xlu0 %v330, 104
      %v473 = vpop.permute.xlu0 %472
      %474 = vrot.lane.b32.xlu0 %v361, 104
      %v475 = vpop.permute.xlu0 %474
      %476 = vrot.lane.b32.xlu0 %v331, 104
      %v477 = vpop.permute.xlu0 %476
      %478 = vrot.lane.b32.xlu0 %v332, 104
      %v479 = vpop.permute.xlu0 %478
      %480 = vrot.lane.b32.xlu0 %v333, 104
      %v481 = vpop.permute.xlu0 %480
      %482 = vrot.lane.b32.xlu0 %v362, 104
      %v483 = vpop.permute.xlu0 %482
      %484 = vrot.lane.b32.xlu0 %v334, 104
      %v485 = vpop.permute.xlu0 %484
      %486 = vrot.lane.b32.xlu0 %v335, 104
      %v487 = vpop.permute.xlu0 %486
      %488 = vrot.lane.b32.xlu0 %v336, 104
      %v489 = vpop.permute.xlu0 %488
      %490 = vrot.lane.b32.xlu0 %v363, 104
      %v491 = vpop.permute.xlu0 %490
      %vm492 = vcmask 850944
      %v493 = vsel %vm492, %v469, %v471
      %v494 = vsel %vm492, %v471, %v473
      %v495 = vsel %vm492, %v473, %v475
      %v496 = vsel %vm492, %v477, %v479
      %v497 = vsel %vm492, %v479, %v481
      %v498 = vsel %vm492, %v481, %v483
      %v499 = vsel %vm492, %v485, %v487
      %v500 = vsel %vm492, %v487, %v489
      %v501 = vsel %vm492, %v489, %v491
      %511 = vst [vmem:[#allocation2 + $0xd8] sm:$0xff] %v493
      %512 = vst [vmem:[#allocation2 + $0xe0] sm:$0xff] %v494
      %513 = vst [vmem:[#allocation2 + $0xe8] sm:$0xff] %v495
      %514 = vst [vmem:[#allocation2 + $0xf0] sm:$0xff] %v496
      %515 = vst [vmem:[#allocation2 + $0xf8] sm:$0xff] %v497
      %516 = vst [vmem:[#allocation2 + $0x100] sm:$0xff] %v498
      %517 = vst [vmem:[#allocation2 + $0x108] sm:$0xff] %v499
      %518 = vst [vmem:[#allocation2 + $0x110] sm:$0xff] %v500
      %519 = vst [vmem:[#allocation2 + $0x118] sm:$0xff] %v501
      %520 = vrot.lane.b32.xlu0 %v328, 103
      %v521 = vpop.permute.xlu0 %520
      %522 = vrot.lane.b32.xlu0 %v329, 103
      %v523 = vpop.permute.xlu0 %522
      %524 = vrot.lane.b32.xlu0 %v330, 103
      %v525 = vpop.permute.xlu0 %524
      %526 = vrot.lane.b32.xlu0 %v361, 103
      %v527 = vpop.permute.xlu0 %526
      %528 = vrot.lane.b32.xlu0 %v331, 103
      %v529 = vpop.permute.xlu0 %528
      %530 = vrot.lane.b32.xlu0 %v332, 103
      %v531 = vpop.permute.xlu0 %530
      %532 = vrot.lane.b32.xlu0 %v333, 103
      %v533 = vpop.permute.xlu0 %532
      %534 = vrot.lane.b32.xlu0 %v362, 103
      %v535 = vpop.permute.xlu0 %534
      %536 = vrot.lane.b32.xlu0 %v334, 103
      %v537 = vpop.permute.xlu0 %536
      %538 = vrot.lane.b32.xlu0 %v335, 103
      %v539 = vpop.permute.xlu0 %538
      %540 = vrot.lane.b32.xlu0 %v336, 103
      %v541 = vpop.permute.xlu0 %540
      %542 = vrot.lane.b32.xlu0 %v363, 103
      %v543 = vpop.permute.xlu0 %542
      %vm544 = vcmask 842752
      %v545 = vsel %vm544, %v521, %v523
      %v546 = vsel %vm544, %v523, %v525
      %v547 = vsel %vm544, %v525, %v527
      %v548 = vsel %vm544, %v529, %v531
      %v549 = vsel %vm544, %v531, %v533
      %v550 = vsel %vm544, %v533, %v535
      %v551 = vsel %vm544, %v537, %v539
      %v552 = vsel %vm544, %v539, %v541
      %v553 = vsel %vm544, %v541, %v543
      %563 = vst [vmem:[#allocation2 + $0x120] sm:$0xff] %v545
      %564 = vst [vmem:[#allocation2 + $0x128] sm:$0xff] %v546
      %565 = vst [vmem:[#allocation2 + $0x130] sm:$0xff] %v547
      %566 = vst [vmem:[#allocation2 + $0x138] sm:$0xff] %v548
      %567 = vst [vmem:[#allocation2 + $0x140] sm:$0xff] %v549
      %568 = vst [vmem:[#allocation2 + $0x148] sm:$0xff] %v550
      %569 = vst [vmem:[#allocation2 + $0x150] sm:$0xff] %v551
      %570 = vst [vmem:[#allocation2 + $0x158] sm:$0xff] %v552
      %571 = vst [vmem:[#allocation2 + $0x160] sm:$0xff] %v553
      %572 = vrot.lane.b32.xlu0 %v328, 102
      %v573 = vpop.permute.xlu0 %572
      %574 = vrot.lane.b32.xlu0 %v329, 102
      %v575 = vpop.permute.xlu0 %574
      %576 = vrot.lane.b32.xlu0 %v330, 102
      %v577 = vpop.permute.xlu0 %576
      %578 = vrot.lane.b32.xlu0 %v361, 102
      %v579 = vpop.permute.xlu0 %578
      %580 = vrot.lane.b32.xlu0 %v331, 102
      %v581 = vpop.permute.xlu0 %580
      %582 = vrot.lane.b32.xlu0 %v332, 102
      %v583 = vpop.permute.xlu0 %582
      %584 = vrot.lane.b32.xlu0 %v333, 102
      %v585 = vpop.permute.xlu0 %584
      %586 = vrot.lane.b32.xlu0 %v362, 102
      %v587 = vpop.permute.xlu0 %586
      %588 = vrot.lane.b32.xlu0 %v334, 102
      %v589 = vpop.permute.xlu0 %588
      %590 = vrot.lane.b32.xlu0 %v335, 102
      %v591 = vpop.permute.xlu0 %590
      %592 = vrot.lane.b32.xlu0 %v336, 102
      %v593 = vpop.permute.xlu0 %592
      %594 = vrot.lane.b32.xlu0 %v363, 102
      %v595 = vpop.permute.xlu0 %594
      %vm596 = vcmask 834560
      %v597 = vsel %vm596, %v573, %v575
      %v598 = vsel %vm596, %v575, %v577
      %v599 = vsel %vm596, %v577, %v579
      %v600 = vsel %vm596, %v581, %v583
      %v601 = vsel %vm596, %v583, %v585
      %v602 = vsel %vm596, %v585, %v587
      %v603 = vsel %vm596, %v589, %v591
      %v604 = vsel %vm596, %v591, %v593
      %v605 = vsel %vm596, %v593, %v595
      %615 = vst [vmem:[#allocation2 + $0x168] sm:$0xff] %v597
      %616 = vst [vmem:[#allocation2 + $0x170] sm:$0xff] %v598
      %617 = vst [vmem:[#allocation2 + $0x178] sm:$0xff] %v599
      %618 = vst [vmem:[#allocation2 + $0x180] sm:$0xff] %v600
      %619 = vst [vmem:[#allocation2 + $0x188] sm:$0xff] %v601
      %620 = vst [vmem:[#allocation2 + $0x190] sm:$0xff] %v602
      %621 = vst [vmem:[#allocation2 + $0x198] sm:$0xff] %v603
      %622 = vst [vmem:[#allocation2 + $0x1a0] sm:$0xff] %v604
      %623 = vst [vmem:[#allocation2 + $0x1a8] sm:$0xff] %v605
      %624 = vrot.lane.b32.xlu0 %v328, 80
      %v625 = vpop.permute.xlu0 %624
      %626 = vrot.lane.b32.xlu0 %v329, 80
      %v627 = vpop.permute.xlu0 %626
      %628 = vrot.lane.b32.xlu0 %v330, 80
      %v629 = vpop.permute.xlu0 %628
      %630 = vrot.lane.b32.xlu0 %v361, 80
      %v631 = vpop.permute.xlu0 %630
      %632 = vrot.lane.b32.xlu0 %v331, 80
      %v633 = vpop.permute.xlu0 %632
      %634 = vrot.lane.b32.xlu0 %v332, 80
      %v635 = vpop.permute.xlu0 %634
      %636 = vrot.lane.b32.xlu0 %v333, 80
      %v637 = vpop.permute.xlu0 %636
      %638 = vrot.lane.b32.xlu0 %v362, 80
      %v639 = vpop.permute.xlu0 %638
      %640 = vrot.lane.b32.xlu0 %v334, 80
      %v641 = vpop.permute.xlu0 %640
      %642 = vrot.lane.b32.xlu0 %v335, 80
      %v643 = vpop.permute.xlu0 %642
      %644 = vrot.lane.b32.xlu0 %v336, 80
      %v645 = vpop.permute.xlu0 %644
      %646 = vrot.lane.b32.xlu0 %v363, 80
      %v647 = vpop.permute.xlu0 %646
      %vm648 = vcmask 654336
      %v649 = vsel %vm648, %v625, %v627
      %v650 = vsel %vm648, %v627, %v629
      %v651 = vsel %vm648, %v629, %v631
      %v652 = vsel %vm648, %v633, %v635
      %v653 = vsel %vm648, %v635, %v637
      %v654 = vsel %vm648, %v637, %v639
      %v655 = vsel %vm648, %v641, %v643
      %v656 = vsel %vm648, %v643, %v645
      %v657 = vsel %vm648, %v645, %v647
      %667 = vst [vmem:[#allocation2 + $0x1b0] sm:$0xff] %v649
      %668 = vst [vmem:[#allocation2 + $0x1b8] sm:$0xff] %v650
      %669 = vst [vmem:[#allocation2 + $0x1c0] sm:$0xff] %v651
      %670 = vst [vmem:[#allocation2 + $0x1c8] sm:$0xff] %v652
      %671 = vst [vmem:[#allocation2 + $0x1d0] sm:$0xff] %v653
      %672 = vst [vmem:[#allocation2 + $0x1d8] sm:$0xff] %v654
      %673 = vst [vmem:[#allocation2 + $0x1e0] sm:$0xff] %v655
      %674 = vst [vmem:[#allocation2 + $0x1e8] sm:$0xff] %v656
      %675 = vst [vmem:[#allocation2 + $0x1f0] sm:$0xff] %v657
      %676 = vrot.lane.b32.xlu0 %v328, 79
      %v677 = vpop.permute.xlu0 %676
      %678 = vrot.lane.b32.xlu0 %v329, 79
      %v679 = vpop.permute.xlu0 %678
      %680 = vrot.lane.b32.xlu0 %v330, 79
      %v681 = vpop.permute.xlu0 %680
      %682 = vrot.lane.b32.xlu0 %v361, 79
      %v683 = vpop.permute.xlu0 %682
      %684 = vrot.lane.b32.xlu0 %v331, 79
      %v685 = vpop.permute.xlu0 %684
      %686 = vrot.lane.b32.xlu0 %v332, 79
      %v687 = vpop.permute.xlu0 %686
      %688 = vrot.lane.b32.xlu0 %v333, 79
      %v689 = vpop.permute.xlu0 %688
      %690 = vrot.lane.b32.xlu0 %v362, 79
      %v691 = vpop.permute.xlu0 %690
      %692 = vrot.lane.b32.xlu0 %v334, 79
      %v693 = vpop.permute.xlu0 %692
      %694 = vrot.lane.b32.xlu0 %v335, 79
      %v695 = vpop.permute.xlu0 %694
      %696 = vrot.lane.b32.xlu0 %v336, 79
      %v697 = vpop.permute.xlu0 %696
      %698 = vrot.lane.b32.xlu0 %v363, 79
      %v699 = vpop.permute.xlu0 %698
      %vm700 = vcmask 646144
      %v701 = vsel %vm700, %v677, %v679
      %v702 = vsel %vm700, %v679, %v681
      %v703 = vsel %vm700, %v681, %v683
      %v704 = vsel %vm700, %v685, %v687
      %v705 = vsel %vm700, %v687, %v689
      %v706 = vsel %vm700, %v689, %v691
      %v707 = vsel %vm700, %v693, %v695
      %v708 = vsel %vm700, %v695, %v697
      %v709 = vsel %vm700, %v697, %v699
      %719 = vst [vmem:[#allocation2 + $0x1f8] sm:$0xff] %v701
      %720 = vst [vmem:[#allocation2 + $0x200] sm:$0xff] %v702
      %721 = vst [vmem:[#allocation2 + $0x208] sm:$0xff] %v703
      %722 = vst [vmem:[#allocation2 + $0x210] sm:$0xff] %v704
      %723 = vst [vmem:[#allocation2 + $0x218] sm:$0xff] %v705
      %724 = vst [vmem:[#allocation2 + $0x220] sm:$0xff] %v706
      %725 = vst [vmem:[#allocation2 + $0x228] sm:$0xff] %v707
      %726 = vst [vmem:[#allocation2 + $0x230] sm:$0xff] %v708
      %727 = vst [vmem:[#allocation2 + $0x238] sm:$0xff] %v709
      %728 = vrot.lane.b32.xlu0 %v328, 78
      %v729 = vpop.permute.xlu0 %728
      %730 = vrot.lane.b32.xlu0 %v329, 78
      %v731 = vpop.permute.xlu0 %730
      %732 = vrot.lane.b32.xlu0 %v330, 78
      %v733 = vpop.permute.xlu0 %732
      %734 = vrot.lane.b32.xlu0 %v361, 78
      %v735 = vpop.permute.xlu0 %734
      %736 = vrot.lane.b32.xlu0 %v331, 78
      %v737 = vpop.permute.xlu0 %736
      %738 = vrot.lane.b32.xlu0 %v332, 78
      %v739 = vpop.permute.xlu0 %738
      %740 = vrot.lane.b32.xlu0 %v333, 78
      %v741 = vpop.permute.xlu0 %740
      %742 = vrot.lane.b32.xlu0 %v362, 78
      %v743 = vpop.permute.xlu0 %742
      %744 = vrot.lane.b32.xlu0 %v334, 78
      %v745 = vpop.permute.xlu0 %744
      %746 = vrot.lane.b32.xlu0 %v335, 78
      %v747 = vpop.permute.xlu0 %746
      %748 = vrot.lane.b32.xlu0 %v336, 78
      %v749 = vpop.permute.xlu0 %748
      %750 = vrot.lane.b32.xlu0 %v363, 78
      %v751 = vpop.permute.xlu0 %750
      %vm752 = vcmask 637952
      %v753 = vsel %vm752, %v729, %v731
      %v754 = vsel %vm752, %v731, %v733
      %v755 = vsel %vm752, %v733, %v735
      %v756 = vsel %vm752, %v737, %v739
      %v757 = vsel %vm752, %v739, %v741
      %v758 = vsel %vm752, %v741, %v743
      %v759 = vsel %vm752, %v745, %v747
      %v760 = vsel %vm752, %v747, %v749
      %v761 = vsel %vm752, %v749, %v751
      %771 = vst [vmem:[#allocation2 + $0x240] sm:$0xff] %v753
      %772 = vst [vmem:[#allocation2 + $0x248] sm:$0xff] %v754
      %773 = vst [vmem:[#allocation2 + $0x250] sm:$0xff] %v755
      %774 = vst [vmem:[#allocation2 + $0x258] sm:$0xff] %v756
      %775 = vst [vmem:[#allocation2 + $0x260] sm:$0xff] %v757
      %776 = vst [vmem:[#allocation2 + $0x268] sm:$0xff] %v758
      %777 = vst [vmem:[#allocation2 + $0x270] sm:$0xff] %v759
      %778 = vst [vmem:[#allocation2 + $0x278] sm:$0xff] %v760
      %779 = vst [vmem:[#allocation2 + $0x280] sm:$0xff] %v761
      %v780 = vld [vmem:[%s2] sm:$0xff]
      %v781 = vld [vmem:[%s2 + $0x8] sm:$0xff]
      %v782 = vld [vmem:[%s2 + $0x10] sm:$0xff]
      %v783 = vld [vmem:[%s2 + $0x18] sm:$0xff]
      %v784 = vld [vmem:[%s2 + $0x20] sm:$0xff]
      %v785 = vld [vmem:[%s2 + $0x28] sm:$0xff]
      %v786 = vld [vmem:[%s2 + $0x30] sm:$0xff]
      %v787 = vld [vmem:[%s2 + $0x38] sm:$0xff]
      %v788 = vld [vmem:[%s2 + $0x40] sm:$0xff]
      %v789 = vld [vmem:[%s2 + $0x48] sm:$0xff]
      %v790 = vld [vmem:[%s2 + $0x50] sm:$0xff]
      %v791 = vld [vmem:[%s2 + $0x58] sm:$0xff]
      %v792 = vld [vmem:[%s2 + $0x60] sm:$0xff]
      %v793 = vld [vmem:[%s2 + $0x68] sm:$0xff]
      %v794 = vld [vmem:[%s2 + $0x70] sm:$0xff]
      %v795 = vld [vmem:[%s2 + $0x78] sm:$0xff]
      %v796 = vld [vmem:[%s2 + $0x80] sm:$0xff]
      %v797 = vld [vmem:[%s2 + $0x88] sm:$0xff]
      %v798 = vld [vmem:[%s2 + $0x90] sm:$0xff]
      %v799 = vld [vmem:[%s2 + $0x98] sm:$0xff]
      %v800 = vld [vmem:[%s2 + $0xa0] sm:$0xff]
      %v801 = vld [vmem:[%s2 + $0xa8] sm:$0xff]
      %v802 = vld [vmem:[%s2 + $0xb0] sm:$0xff]
      %v803 = vld [vmem:[%s2 + $0xb8] sm:$0xff]
      %v804 = vld [vmem:[%s2 + $0xc0] sm:$0xff]
      %v805 = vld [vmem:[%s2 + $0xc8] sm:$0xff]
      %v806 = vld [vmem:[%s2 + $0xd0] sm:$0xff]
      %v807 = vld [vmem:[%s2 + $0xd8] sm:$0xff]
      %v808 = vld [vmem:[%s2 + $0xe0] sm:$0xff]
      %v809 = vld [vmem:[%s2 + $0xe8] sm:$0xff]
      %v810 = vld [vmem:[%s2 + $0xf0] sm:$0xff]
      %v811 = vld [vmem:[%s2 + $0xf8] sm:$0xff]
      %v812 = vld [vmem:[#allocation2] sm:$0xff]
      %v813 = vld [vmem:[#allocation2 + $0x8] sm:$0xff]
      %v814 = vld [vmem:[#allocation2 + $0x10] sm:$0xff]
      %v815 = vld [vmem:[#allocation2 + $0x18] sm:$0xff]
      %v816 = vld [vmem:[#allocation2 + $0x20] sm:$0xff]
      %v817 = vld [vmem:[#allocation2 + $0x28] sm:$0xff]
      %v818 = vld [vmem:[#allocation2 + $0x30] sm:$0xff]
      %v819 = vld [vmem:[#allocation2 + $0x38] sm:$0xff]
      %v820 = vld [vmem:[#allocation2 + $0x40] sm:$0xff]
      %v821 = vld [vmem:[#allocation2 + $0x48] sm:$0xff]
      %v822 = vld [vmem:[#allocation2 + $0x50] sm:$0xff]
      %v823 = vld [vmem:[#allocation2 + $0x58] sm:$0xff]
      %v824 = vld [vmem:[#allocation2 + $0x60] sm:$0xff]
      %v825 = vld [vmem:[#allocation2 + $0x68] sm:$0xff]
      %v826 = vld [vmem:[#allocation2 + $0x70] sm:$0xff]
      %v827 = vld [vmem:[#allocation2 + $0x78] sm:$0xff]
      %v828 = vld [vmem:[#allocation2 + $0x80] sm:$0xff]
      %v829 = vld [vmem:[#allocation2 + $0x88] sm:$0xff]
      %v830 = vld [vmem:[#allocation2 + $0x90] sm:$0xff]
      %v831 = vld [vmem:[#allocation2 + $0x98] sm:$0xff]
      %v832 = vld [vmem:[#allocation2 + $0xa0] sm:$0xff]
      %v833 = vld [vmem:[#allocation2 + $0xa8] sm:$0xff]
      %v834 = vld [vmem:[#allocation2 + $0xb0] sm:$0xff]
      %v835 = vld [vmem:[#allocation2 + $0xb8] sm:$0xff]
      %v836 = vld [vmem:[#allocation2 + $0xc0] sm:$0xff]
      %v837 = vld [vmem:[#allocation2 + $0xc8] sm:$0xff]
      %v838 = vld [vmem:[#allocation2 + $0xd0] sm:$0xff]
      %v839 = vld [vmem:[#allocation2 + $0xd8] sm:$0xff]
      %v840 = vld [vmem:[#allocation2 + $0xe0] sm:$0xff]
      %v841 = vld [vmem:[#allocation2 + $0xe8] sm:$0xff]
      %v842 = vld [vmem:[#allocation2 + $0xf0] sm:$0xff]
      %v843 = vld [vmem:[#allocation2 + $0xf8] sm:$0xff]
      %v844 = vld [vmem:[#allocation2 + $0x100] sm:$0xff]
      %v845 = vld [vmem:[#allocation2 + $0x108] sm:$0xff]
      %v846 = vld [vmem:[#allocation2 + $0x110] sm:$0xff]
      %v847 = vld [vmem:[#allocation2 + $0x118] sm:$0xff]
      %v848 = vld [vmem:[#allocation2 + $0x120] sm:$0xff]
      %v849 = vld [vmem:[#allocation2 + $0x128] sm:$0xff]
      %v850 = vld [vmem:[#allocation2 + $0x130] sm:$0xff]
      %v851 = vld [vmem:[#allocation2 + $0x138] sm:$0xff]
      %v852 = vld [vmem:[#allocation2 + $0x140] sm:$0xff]
      %v853 = vld [vmem:[#allocation2 + $0x148] sm:$0xff]
      %v854 = vld [vmem:[#allocation2 + $0x150] sm:$0xff]
      %v855 = vld [vmem:[#allocation2 + $0x158] sm:$0xff]
      %v856 = vld [vmem:[#allocation2 + $0x160] sm:$0xff]
      %v857 = vld [vmem:[#allocation2 + $0x168] sm:$0xff]
      %v858 = vld [vmem:[#allocation2 + $0x170] sm:$0xff]
      %v859 = vld [vmem:[#allocation2 + $0x178] sm:$0xff]
      %v860 = vld [vmem:[#allocation2 + $0x180] sm:$0xff]
      %v861 = vld [vmem:[#allocation2 + $0x188] sm:$0xff]
      %v862 = vld [vmem:[#allocation2 + $0x190] sm:$0xff]
      %v863 = vld [vmem:[#allocation2 + $0x198] sm:$0xff]
      %v864 = vld [vmem:[#allocation2 + $0x1a0] sm:$0xff]
      %v865 = vld [vmem:[#allocation2 + $0x1a8] sm:$0xff]
      %v866 = vld [vmem:[#allocation2 + $0x1b0] sm:$0xff]
      %v867 = vld [vmem:[#allocation2 + $0x1b8] sm:$0xff]
      %v868 = vld [vmem:[#allocation2 + $0x1c0] sm:$0xff]
      %v869 = vld [vmem:[#allocation2 + $0x1c8] sm:$0xff]
      %v870 = vld [vmem:[#allocation2 + $0x1d0] sm:$0xff]
      %v871 = vld [vmem:[#allocation2 + $0x1d8] sm:$0xff]
      %v872 = vld [vmem:[#allocation2 + $0x1e0] sm:$0xff]
      %v873 = vld [vmem:[#allocation2 + $0x1e8] sm:$0xff]
      %v874 = vld [vmem:[#allocation2 + $0x1f0] sm:$0xff]
      %v875 = vld [vmem:[#allocation2 + $0x1f8] sm:$0xff]
      %v876 = vld [vmem:[#allocation2 + $0x200] sm:$0xff]
      %v877 = vld [vmem:[#allocation2 + $0x208] sm:$0xff]
      %v878 = vld [vmem:[#allocation2 + $0x210] sm:$0xff]
      %v879 = vld [vmem:[#allocation2 + $0x218] sm:$0xff]
      %v880 = vld [vmem:[#allocation2 + $0x220] sm:$0xff]
      %v881 = vld [vmem:[#allocation2 + $0x228] sm:$0xff]
      %v882 = vld [vmem:[#allocation2 + $0x230] sm:$0xff]
      %v883 = vld [vmem:[#allocation2 + $0x238] sm:$0xff]
      %v884 = vld [vmem:[#allocation2 + $0x240] sm:$0xff]
      %v885 = vld [vmem:[#allocation2 + $0x248] sm:$0xff]
      %v886 = vld [vmem:[#allocation2 + $0x250] sm:$0xff]
      %v887 = vld [vmem:[#allocation2 + $0x258] sm:$0xff]
      %v888 = vld [vmem:[#allocation2 + $0x260] sm:$0xff]
      %v889 = vld [vmem:[#allocation2 + $0x268] sm:$0xff]
      %v890 = vld [vmem:[#allocation2 + $0x270] sm:$0xff]
      %v891 = vld [vmem:[#allocation2 + $0x278] sm:$0xff]
      %v892 = vld [vmem:[#allocation2 + $0x280] sm:$0xff]
      %v925 = vunpack.c.l.b16 %v780
      %v926 = vunpack.c.h.b16 %v780
      %v927 = vunpack.c.l.b16 %v781
      %v928 = vunpack.c.h.b16 %v781
      %v929 = vunpack.c.l.b16 %v782
      %v930 = vunpack.c.h.b16 %v782
      %v931 = vunpack.c.l.b16 %v783
      %v932 = vunpack.c.h.b16 %v783
      %v933 = vunpack.c.l.b16 %v784
      %v934 = vunpack.c.h.b16 %v784
      %v935 = vunpack.c.l.b16 %v785
      %v936 = vunpack.c.h.b16 %v785
      %v937 = vunpack.c.l.b16 %v786
      %v938 = vunpack.c.h.b16 %v786
      %v939 = vunpack.c.l.b16 %v787
      %v940 = vunpack.c.h.b16 %v787
      %v941 = vunpack.c.l.b16 %v788
      %v942 = vunpack.c.h.b16 %v788
      %v943 = vunpack.c.l.b16 %v789
      %v944 = vunpack.c.h.b16 %v789
      %v945 = vunpack.c.l.b16 %v790
      %v946 = vunpack.c.h.b16 %v790
      %v947 = vunpack.c.l.b16 %v791
      %v948 = vunpack.c.h.b16 %v791
      %v949 = vunpack.c.l.b16 %v792
      %v950 = vunpack.c.h.b16 %v792
      %v951 = vunpack.c.l.b16 %v793
      %v952 = vunpack.c.h.b16 %v793
      %v953 = vunpack.c.l.b16 %v794
      %v954 = vunpack.c.h.b16 %v794
      %v955 = vunpack.c.l.b16 %v795
      %v956 = vunpack.c.h.b16 %v795
      %v957 = vunpack.c.l.b16 %v796
      %v958 = vunpack.c.h.b16 %v796
      %v959 = vunpack.c.l.b16 %v797
      %v960 = vunpack.c.h.b16 %v797
      %v961 = vunpack.c.l.b16 %v798
      %v962 = vunpack.c.h.b16 %v798
      %v963 = vunpack.c.l.b16 %v799
      %v964 = vunpack.c.h.b16 %v799
      %v965 = vunpack.c.l.b16 %v800
      %v966 = vunpack.c.h.b16 %v800
      %v967 = vunpack.c.l.b16 %v801
      %v968 = vunpack.c.h.b16 %v801
      %v969 = vunpack.c.l.b16 %v802
      %v970 = vunpack.c.h.b16 %v802
      %v971 = vunpack.c.l.b16 %v803
      %v972 = vunpack.c.h.b16 %v803
      %v973 = vunpack.c.l.b16 %v804
      %v974 = vunpack.c.h.b16 %v804
      %v975 = vunpack.c.l.b16 %v805
      %v976 = vunpack.c.h.b16 %v805
      %v977 = vunpack.c.l.b16 %v806
      %v978 = vunpack.c.h.b16 %v806
      %v979 = vunpack.c.l.b16 %v807
      %v980 = vunpack.c.h.b16 %v807
      %v981 = vunpack.c.l.b16 %v808
      %v982 = vunpack.c.h.b16 %v808
      %v983 = vunpack.c.l.b16 %v809
      %v984 = vunpack.c.h.b16 %v809
      %v985 = vunpack.c.l.b16 %v810
      %v986 = vunpack.c.h.b16 %v810
      %v987 = vunpack.c.l.b16 %v811
      %v988 = vunpack.c.h.b16 %v811
      %v989 = vpack.c.b16 %v929, %v925
      %v990 = vpack.c.b16 %v930, %v926
      %v991 = vpack.c.b16 %v931, %v927
      %v992 = vpack.c.b16 %v932, %v928
      %v993 = vpack.c.b16 %v937, %v933
      %v994 = vpack.c.b16 %v938, %v934
      %v995 = vpack.c.b16 %v939, %v935
      %v996 = vpack.c.b16 %v940, %v936
      %v997 = vpack.c.b16 %v945, %v941
      %v998 = vpack.c.b16 %v946, %v942
      %v999 = vpack.c.b16 %v947, %v943
      %v1000 = vpack.c.b16 %v948, %v944
      %v1001 = vpack.c.b16 %v953, %v949
      %v1002 = vpack.c.b16 %v954, %v950
      %v1003 = vpack.c.b16 %v955, %v951
      %v1004 = vpack.c.b16 %v956, %v952
      %v1005 = vpack.c.b16 %v961, %v957
      %v1006 = vpack.c.b16 %v962, %v958
      %v1007 = vpack.c.b16 %v963, %v959
      %v1008 = vpack.c.b16 %v964, %v960
      %v1009 = vpack.c.b16 %v969, %v965
      %v1010 = vpack.c.b16 %v970, %v966
      %v1011 = vpack.c.b16 %v971, %v967
      %v1012 = vpack.c.b16 %v972, %v968
      %v1013 = vpack.c.b16 %v977, %v973
      %v1014 = vpack.c.b16 %v978, %v974
      %v1015 = vpack.c.b16 %v979, %v975
      %v1016 = vpack.c.b16 %v980, %v976
      %v1017 = vpack.c.b16 %v985, %v981
      %v1018 = vpack.c.b16 %v986, %v982
      %v1019 = vpack.c.b16 %v987, %v983
      %v1020 = vpack.c.b16 %v988, %v984
      %vm1045 = vcmask 392192
      %v1047 = vsel %vm1045, %v992, 0
      %v1050 = vsel %vm1045, %v996, 0
      %v1053 = vsel %vm1045, %v1000, 0
      %v1056 = vsel %vm1045, %v1004, 0
      %v1059 = vsel %vm1045, %v1008, 0
      %v1062 = vsel %vm1045, %v1012, 0
      %v1065 = vsel %vm1045, %v1016, 0
      %v1068 = vsel %vm1045, %v1020, 0
      %1070 = vmatprep.subr.bf16.mxu0 %v813
      %1071 = vmatpush1.bf16.msra.mxu0 %v812
      %1072 = vmatprep.subr.bf16.mxu0 %v816
      %1073 = vmatpush1.bf16.msra.mxu0 %v815
      %1074 = vmatprep.subr.bf16.mxu0 %v819
      %1075 = vmatpush1.bf16.msra.mxu0 %v818
      %1076 = vmatprep.subr.bf16.mxu0 %v822
      %1077 = vmatpush1.bf16.msra.mxu0 %v821
      %1078 = vmatprep.subr.bf16.mxu0 %v825
      %1079 = vmatpush1.bf16.msra.mxu0 %v824
      %1080 = vmatprep.subr.bf16.mxu0 %v828
      %1081 = vmatpush1.bf16.msra.mxu0 %v827
      %1082 = vmatprep.subr.bf16.mxu0 %v831
      %1083 = vmatpush1.bf16.msra.mxu0 %v830
      %1084 = vmatprep.subr.bf16.mxu0 %v834
      %1085 = vmatpush1.bf16.msra.mxu0 %v833
      %1086 = vmatprep.subr.bf16.mxu0 %v837
      %1087 = vmatpush1.bf16.msra.mxu0 %v836
      %1088 = vmatprep.subr.bf16.mxu0 %v840
      %1089 = vmatpush1.bf16.msra.mxu0 %v839
      %1090 = vmatprep.subr.bf16.mxu0 %v843
      %1091 = vmatpush1.bf16.msra.mxu0 %v842
      %1092 = vmatprep.subr.bf16.mxu0 %v846
      %1093 = vmatpush1.bf16.msra.mxu0 %v845
      %1094 = vmatprep.subr.bf16.mxu0 %v849
      %1095 = vmatpush1.bf16.msra.mxu0 %v848
      %1096 = vmatprep.subr.bf16.mxu0 %v852
      %1097 = vmatpush1.bf16.msra.mxu0 %v851
      %1098 = vmatprep.subr.bf16.mxu0 %v855
      %1099 = vmatpush1.bf16.msra.mxu0 %v854
      %1100 = vmatprep.subr.bf16.mxu0 %v858
      %1101 = vmatpush1.bf16.msra.mxu0 %v857
      %1102 = vmatprep.mubr.bf16.mxu0 %v990
      %1103 = vmatmul.mubr.bf16.gmra.mrb[0].mxu0 %v989
      %v1104 = vpop.f32.mrb[0].mxu0
      %v1105 = vadd.f32 0.0, %v1104
      %v1106 = vpop.f32.mrb[0].mxu0
      %v1107 = vadd.f32 0.0, %v1106
      %v1108 = vpop.f32.mrb[0].mxu0
      %v1109 = vadd.f32 0.0, %v1108
      %v1110 = vpop.f32.mrb[0].mxu0
      %v1111 = vadd.f32 0.0, %v1110
      %1112 = vmatprep.mubr.bf16.mxu0 %v994
      %1113 = vmatmul.mubr.bf16.gmra.mrb[0].mxu0 %v993
      %v1114 = vpop.f32.mrb[0].mxu0
      %v1115 = vadd.f32 0.0, %v1114
      %v1116 = vpop.f32.mrb[0].mxu0
      %v1117 = vadd.f32 0.0, %v1116
      %v1118 = vpop.f32.mrb[0].mxu0
      %v1119 = vadd.f32 0.0, %v1118
      %v1120 = vpop.f32.mrb[0].mxu0
      %v1121 = vadd.f32 0.0, %v1120
      %1122 = vmatprep.mubr.bf16.mxu0 %v998
      %1123 = vmatmul.mubr.bf16.gmra.mrb[0].mxu0 %v997
      %v1124 = vpop.f32.mrb[0].mxu0
      %v1125 = vadd.f32 0.0, %v1124
      %v1126 = vpop.f32.mrb[0].mxu0
      %v1127 = vadd.f32 0.0, %v1126
      %v1128 = vpop.f32.mrb[0].mxu0
      %v1129 = vadd.f32 0.0, %v1128
      %v1130 = vpop.f32.mrb[0].mxu0
      %v1131 = vadd.f32 0.0, %v1130
      %1132 = vmatprep.mubr.bf16.mxu0 %v1002
      %1133 = vmatmul.mubr.bf16.gmra.mrb[0].mxu0 %v1001
      %v1134 = vpop.f32.mrb[0].mxu0
      %v1135 = vadd.f32 0.0, %v1134
      %v1136 = vpop.f32.mrb[0].mxu0
      %v1137 = vadd.f32 0.0, %v1136
      %v1138 = vpop.f32.mrb[0].mxu0
      %v1139 = vadd.f32 0.0, %v1138
      %v1140 = vpop.f32.mrb[0].mxu0
      %v1141 = vadd.f32 0.0, %v1140
      %1142 = vmatprep.mubr.bf16.mxu0 %v1006
      %1143 = vmatmul.mubr.bf16.gmra.mrb[0].mxu0 %v1005
      %v1144 = vpop.f32.mrb[0].mxu0
      %v1145 = vadd.f32 0.0, %v1144
      %v1146 = vpop.f32.mrb[0].mxu0
      %v1147 = vadd.f32 0.0, %v1146
      %v1148 = vpop.f32.mrb[0].mxu0
      %v1149 = vadd.f32 0.0, %v1148
      %v1150 = vpop.f32.mrb[0].mxu0
      %v1151 = vadd.f32 0.0, %v1150
      %1152 = vmatprep.mubr.bf16.mxu0 %v1010
      %1153 = vmatmul.mubr.bf16.gmra.mrb[0].mxu0 %v1009
      %v1154 = vpop.f32.mrb[0].mxu0
      %v1155 = vadd.f32 0.0, %v1154
      %v1156 = vpop.f32.mrb[0].mxu0
      %v1157 = vadd.f32 0.0, %v1156
      %v1158 = vpop.f32.mrb[0].mxu0
      %v1159 = vadd.f32 0.0, %v1158
      %v1160 = vpop.f32.mrb[0].mxu0
      %v1161 = vadd.f32 0.0, %v1160
      %1162 = vmatprep.mubr.bf16.mxu0 %v1014
      %1163 = vmatmul.mubr.bf16.gmra.mrb[0].mxu0 %v1013
      %v1164 = vpop.f32.mrb[0].mxu0
      %v1165 = vadd.f32 0.0, %v1164
      %v1166 = vpop.f32.mrb[0].mxu0
      %v1167 = vadd.f32 0.0, %v1166
      %v1168 = vpop.f32.mrb[0].mxu0
      %v1169 = vadd.f32 0.0, %v1168
      %v1170 = vpop.f32.mrb[0].mxu0
      %v1171 = vadd.f32 0.0, %v1170
      %1172 = vmatprep.mubr.bf16.mxu0 %v1018
      %1173 = vmatmul.mubr.bf16.gmra.mrb[0].mxu0 %v1017
      %v1174 = vpop.f32.mrb[0].mxu0
      %v1175 = vadd.f32 0.0, %v1174
      %v1176 = vpop.f32.mrb[0].mxu0
      %v1177 = vadd.f32 0.0, %v1176
      %v1178 = vpop.f32.mrb[0].mxu0
      %v1179 = vadd.f32 0.0, %v1178
      %v1180 = vpop.f32.mrb[0].mxu0
      %v1181 = vadd.f32 0.0, %v1180
      %1182 = vdwg.mxu0
      %1183 = vmatprep.subr.bf16.mxu0 %v861
      %1184 = vmatpush1.bf16.msra.mxu0 %v860
      %1185 = vmatprep.subr.bf16.mxu0 %v864
      %1186 = vmatpush1.bf16.msra.mxu0 %v863
      %1187 = vmatprep.subr.bf16.mxu0 %v867
      %1188 = vmatpush1.bf16.msra.mxu0 %v866
      %1189 = vmatprep.subr.bf16.mxu0 %v870
      %1190 = vmatpush1.bf16.msra.mxu0 %v869
      %1191 = vmatprep.subr.bf16.mxu0 %v873
      %1192 = vmatpush1.bf16.msra.mxu0 %v872
      %1193 = vmatprep.subr.bf16.mxu0 %v876
      %1194 = vmatpush1.bf16.msra.mxu0 %v875
      %1195 = vmatprep.subr.bf16.mxu0 %v879
      %1196 = vmatpush1.bf16.msra.mxu0 %v878
      %1197 = vmatprep.subr.bf16.mxu0 %v882
      %1198 = vmatpush1.bf16.msra.mxu0 %v881
      %1199 = vmatprep.subr.bf16.mxu0 %v885
      %1200 = vmatpush1.bf16.msra.mxu0 %v884
      %1201 = vmatprep.subr.bf16.mxu0 %v888
      %1202 = vmatpush1.bf16.msra.mxu0 %v887
      %1203 = vmatprep.subr.bf16.mxu0 %v891
      %1204 = vmatpush1.bf16.msra.mxu0 %v890
      %1205 = vmatprep.subr.bf16.mxu0 0
      %1206 = vmatpush1.bf16.msra.mxu0 0
      %1207 = vmatprep.subr.bf16.mxu0 0
      %1208 = vmatpush1.bf16.msra.mxu0 0
      %1209 = vmatprep.subr.bf16.mxu0 0
      %1210 = vmatpush1.bf16.msra.mxu0 0
      %1211 = vmatprep.subr.bf16.mxu0 0
      %1212 = vmatpush1.bf16.msra.mxu0 0
      %1213 = vmatprep.subr.bf16.mxu0 0
      %1214 = vmatpush1.bf16.msra.mxu0 0
      %1215 = vmatprep.mubr.bf16.mxu0 %v1047
      %1216 = vmatmul.mubr.bf16.gmra.mrb[0].mxu0 %v991
      %v1217 = vpop.f32.mrb[0].mxu0
      %v1218 = vadd.f32 %v1105, %v1217
      %v1219 = vpop.f32.mrb[0].mxu0
      %v1220 = vadd.f32 %v1107, %v1219
      %v1221 = vpop.f32.mrb[0].mxu0
      %v1222 = vadd.f32 %v1109, %v1221
      %v1223 = vpop.f32.mrb[0].mxu0
      %v1224 = vadd.f32 %v1111, %v1223
      %1225 = vmatprep.mubr.bf16.mxu0 %v1050
      %1226 = vmatmul.mubr.bf16.gmra.mrb[0].mxu0 %v995
      %v1227 = vpop.f32.mrb[0].mxu0
      %v1228 = vadd.f32 %v1115, %v1227
      %v1229 = vpop.f32.mrb[0].mxu0
      %v1230 = vadd.f32 %v1117, %v1229
      %v1231 = vpop.f32.mrb[0].mxu0
      %v1232 = vadd.f32 %v1119, %v1231
      %v1233 = vpop.f32.mrb[0].mxu0
      %v1234 = vadd.f32 %v1121, %v1233
      %1235 = vmatprep.mubr.bf16.mxu0 %v1053
      %1236 = vmatmul.mubr.bf16.gmra.mrb[0].mxu0 %v999
      %v1237 = vpop.f32.mrb[0].mxu0
      %v1238 = vadd.f32 %v1125, %v1237
      %v1239 = vpop.f32.mrb[0].mxu0
      %v1240 = vadd.f32 %v1127, %v1239
      %v1241 = vpop.f32.mrb[0].mxu0
      %v1242 = vadd.f32 %v1129, %v1241
      %v1243 = vpop.f32.mrb[0].mxu0
      %v1244 = vadd.f32 %v1131, %v1243
      %1245 = vmatprep.mubr.bf16.mxu0 %v1056
      %1246 = vmatmul.mubr.bf16.gmra.mrb[0].mxu0 %v1003
      %v1247 = vpop.f32.mrb[0].mxu0
      %v1248 = vadd.f32 %v1135, %v1247
      %v1249 = vpop.f32.mrb[0].mxu0
      %v1250 = vadd.f32 %v1137, %v1249
      %v1251 = vpop.f32.mrb[0].mxu0
      %v1252 = vadd.f32 %v1139, %v1251
      %v1253 = vpop.f32.mrb[0].mxu0
      %v1254 = vadd.f32 %v1141, %v1253
      %1255 = vmatprep.mubr.bf16.mxu0 %v1059
      %1256 = vmatmul.mubr.bf16.gmra.mrb[0].mxu0 %v1007
      %v1257 = vpop.f32.mrb[0].mxu0
      %v1258 = vadd.f32 %v1145, %v1257
      %v1259 = vpop.f32.mrb[0].mxu0
      %v1260 = vadd.f32 %v1147, %v1259
      %v1261 = vpop.f32.mrb[0].mxu0
      %v1262 = vadd.f32 %v1149, %v1261
      %v1263 = vpop.f32.mrb[0].mxu0
      %v1264 = vadd.f32 %v1151, %v1263
      %1265 = vmatprep.mubr.bf16.mxu0 %v1062
      %1266 = vmatmul.mubr.bf16.gmra.mrb[0].mxu0 %v1011
      %v1267 = vpop.f32.mrb[0].mxu0
      %v1268 = vadd.f32 %v1155, %v1267
      %v1269 = vpop.f32.mrb[0].mxu0
      %v1270 = vadd.f32 %v1157, %v1269
      %v1271 = vpop.f32.mrb[0].mxu0
      %v1272 = vadd.f32 %v1159, %v1271
      %v1273 = vpop.f32.mrb[0].mxu0
      %v1274 = vadd.f32 %v1161, %v1273
      %1275 = vmatprep.mubr.bf16.mxu0 %v1065
      %1276 = vmatmul.mubr.bf16.gmra.mrb[0].mxu0 %v1015
      %v1277 = vpop.f32.mrb[0].mxu0
      %v1278 = vadd.f32 %v1165, %v1277
      %v1279 = vpop.f32.mrb[0].mxu0
      %v1280 = vadd.f32 %v1167, %v1279
      %v1281 = vpop.f32.mrb[0].mxu0
      %v1282 = vadd.f32 %v1169, %v1281
      %v1283 = vpop.f32.mrb[0].mxu0
      %v1284 = vadd.f32 %v1171, %v1283
      %1285 = vmatprep.mubr.bf16.mxu0 %v1068
      %1286 = vmatmul.mubr.bf16.gmra.mrb[0].mxu0 %v1019
      %v1287 = vpop.f32.mrb[0].mxu0
      %v1288 = vadd.f32 %v1175, %v1287
      %v1289 = vpop.f32.mrb[0].mxu0
      %v1290 = vadd.f32 %v1177, %v1289
      %v1291 = vpop.f32.mrb[0].mxu0
      %v1292 = vadd.f32 %v1179, %v1291
      %v1293 = vpop.f32.mrb[0].mxu0
      %v1294 = vadd.f32 %v1181, %v1293
      %1295 = vdwg.mxu0
      %1296 = vmatprep.subr.bf16.mxu0 0
      %1297 = vmatpush1.bf16.msra.mxu0 %v814
      %1298 = vmatprep.subr.bf16.mxu0 0
      %1299 = vmatpush1.bf16.msra.mxu0 %v817
      %1300 = vmatprep.subr.bf16.mxu0 0
      %1301 = vmatpush1.bf16.msra.mxu0 %v820
      %1302 = vmatprep.subr.bf16.mxu0 0
      %1303 = vmatpush1.bf16.msra.mxu0 %v823
      %1304 = vmatprep.subr.bf16.mxu0 0
      %1305 = vmatpush1.bf16.msra.mxu0 %v826
      %1306 = vmatprep.subr.bf16.mxu0 0
      %1307 = vmatpush1.bf16.msra.mxu0 %v829
      %1308 = vmatprep.subr.bf16.mxu0 0
      %1309 = vmatpush1.bf16.msra.mxu0 %v832
      %1310 = vmatprep.subr.bf16.mxu0 0
      %1311 = vmatpush1.bf16.msra.mxu0 %v835
      %1312 = vmatprep.subr.bf16.mxu0 0
      %1313 = vmatpush1.bf16.msra.mxu0 %v838
      %1314 = vmatprep.subr.bf16.mxu0 0
      %1315 = vmatpush1.bf16.msra.mxu0 %v841
      %1316 = vmatprep.subr.bf16.mxu0 0
      %1317 = vmatpush1.bf16.msra.mxu0 %v844
      %1318 = vmatprep.subr.bf16.mxu0 0
      %1319 = vmatpush1.bf16.msra.mxu0 %v847
      %1320 = vmatprep.subr.bf16.mxu0 0
      %1321 = vmatpush1.bf16.msra.mxu0 %v850
      %1322 = vmatprep.subr.bf16.mxu0 0
      %1323 = vmatpush1.bf16.msra.mxu0 %v853
      %1324 = vmatprep.subr.bf16.mxu0 0
      %1325 = vmatpush1.bf16.msra.mxu0 %v856
      %1326 = vmatprep.subr.bf16.mxu0 0
      %1327 = vmatpush1.bf16.msra.mxu0 %v859
      %1328 = vmatprep.mubr.bf16.mxu0 %v990
      %1329 = vmatmul.mubr.bf16.gmra.mrb[0].mxu0 %v989
      %v1330 = vpop.f32.mrb[0].mxu0
      %v1331 = vadd.f32 0.0, %v1330
      %v1332 = vpop.f32.mrb[0].mxu0
      %v1333 = vpop.f32.mrb[0].mxu0
      %v1334 = vadd.f32 0.0, %v1333
      %v1335 = vpop.f32.mrb[0].mxu0
      %1336 = vmatprep.mubr.bf16.mxu0 %v994
      %1337 = vmatmul.mubr.bf16.gmra.mrb[0].mxu0 %v993
      %v1338 = vpop.f32.mrb[0].mxu0
      %v1339 = vadd.f32 0.0, %v1338
      %v1340 = vpop.f32.mrb[0].mxu0
      %v1341 = vpop.f32.mrb[0].mxu0
      %v1342 = vadd.f32 0.0, %v1341
      %v1343 = vpop.f32.mrb[0].mxu0
      %1344 = vmatprep.mubr.bf16.mxu0 %v998
      %1345 = vmatmul.mubr.bf16.gmra.mrb[0].mxu0 %v997
      %v1346 = vpop.f32.mrb[0].mxu0
      %v1347 = vadd.f32 0.0, %v1346
      %v1348 = vpop.f32.mrb[0].mxu0
      %v1349 = vpop.f32.mrb[0].mxu0
      %v1350 = vadd.f32 0.0, %v1349
      %v1351 = vpop.f32.mrb[0].mxu0
      %1352 = vmatprep.mubr.bf16.mxu0 %v1002
      %1353 = vmatmul.mubr.bf16.gmra.mrb[0].mxu0 %v1001
      %v1354 = vpop.f32.mrb[0].mxu0
      %v1355 = vadd.f32 0.0, %v1354
      %v1356 = vpop.f32.mrb[0].mxu0
      %v1357 = vpop.f32.mrb[0].mxu0
      %v1358 = vadd.f32 0.0, %v1357
      %v1359 = vpop.f32.mrb[0].mxu0
      %1360 = vmatprep.mubr.bf16.mxu0 %v1006
      %1361 = vmatmul.mubr.bf16.gmra.mrb[0].mxu0 %v1005
      %v1362 = vpop.f32.mrb[0].mxu0
      %v1363 = vadd.f32 0.0, %v1362
      %v1364 = vpop.f32.mrb[0].mxu0
      %v1365 = vpop.f32.mrb[0].mxu0
      %v1366 = vadd.f32 0.0, %v1365
      %v1367 = vpop.f32.mrb[0].mxu0
      %1368 = vmatprep.mubr.bf16.mxu0 %v1010
      %1369 = vmatmul.mubr.bf16.gmra.mrb[0].mxu0 %v1009
      %v1370 = vpop.f32.mrb[0].mxu0
      %v1371 = vadd.f32 0.0, %v1370
      %v1372 = vpop.f32.mrb[0].mxu0
      %v1373 = vpop.f32.mrb[0].mxu0
      %v1374 = vadd.f32 0.0, %v1373
      %v1375 = vpop.f32.mrb[0].mxu0
      %1376 = vmatprep.mubr.bf16.mxu0 %v1014
      %1377 = vmatmul.mubr.bf16.gmra.mrb[0].mxu0 %v1013
      %v1378 = vpop.f32.mrb[0].mxu0
      %v1379 = vadd.f32 0.0, %v1378
      %v1380 = vpop.f32.mrb[0].mxu0
      %v1381 = vpop.f32.mrb[0].mxu0
      %v1382 = vadd.f32 0.0, %v1381
      %v1383 = vpop.f32.mrb[0].mxu0
      %1384 = vmatprep.mubr.bf16.mxu0 %v1018
      %1385 = vmatmul.mubr.bf16.gmra.mrb[0].mxu0 %v1017
      %v1386 = vpop.f32.mrb[0].mxu0
      %v1387 = vadd.f32 0.0, %v1386
      %v1388 = vpop.f32.mrb[0].mxu0
      %v1389 = vpop.f32.mrb[0].mxu0
      %v1390 = vadd.f32 0.0, %v1389
      %v1391 = vpop.f32.mrb[0].mxu0
      %1392 = vdwg.mxu0
      %1393 = vmatprep.subr.bf16.mxu0 0
      %1394 = vmatpush1.bf16.msra.mxu0 %v862
      %1395 = vmatprep.subr.bf16.mxu0 0
      %1396 = vmatpush1.bf16.msra.mxu0 %v865
      %1397 = vmatprep.subr.bf16.mxu0 0
      %1398 = vmatpush1.bf16.msra.mxu0 %v868
      %1399 = vmatprep.subr.bf16.mxu0 0
      %1400 = vmatpush1.bf16.msra.mxu0 %v871
      %1401 = vmatprep.subr.bf16.mxu0 0
      %1402 = vmatpush1.bf16.msra.mxu0 %v874
      %1403 = vmatprep.subr.bf16.mxu0 0
      %1404 = vmatpush1.bf16.msra.mxu0 %v877
      %1405 = vmatprep.subr.bf16.mxu0 0
      %1406 = vmatpush1.bf16.msra.mxu0 %v880
      %1407 = vmatprep.subr.bf16.mxu0 0
      %1408 = vmatpush1.bf16.msra.mxu0 %v883
      %1409 = vmatprep.subr.bf16.mxu0 0
      %1410 = vmatpush1.bf16.msra.mxu0 %v886
      %1411 = vmatprep.subr.bf16.mxu0 0
      %1412 = vmatpush1.bf16.msra.mxu0 %v889
      %1413 = vmatprep.subr.bf16.mxu0 0
      %1414 = vmatpush1.bf16.msra.mxu0 %v892
      %1415 = vmatprep.subr.bf16.mxu0 0
      %1416 = vmatpush1.bf16.msra.mxu0 0
      %1417 = vmatprep.subr.bf16.mxu0 0
      %1418 = vmatpush1.bf16.msra.mxu0 0
      %1419 = vmatprep.subr.bf16.mxu0 0
      %1420 = vmatpush1.bf16.msra.mxu0 0
      %1421 = vmatprep.subr.bf16.mxu0 0
      %1422 = vmatpush1.bf16.msra.mxu0 0
      %1423 = vmatprep.subr.bf16.mxu0 0
      %1424 = vmatpush1.bf16.msra.mxu0 0
      %1425 = vmatprep.mubr.bf16.mxu0 %v1047
      %1426 = vmatmul.mubr.bf16.gmra.mrb[0].mxu0 %v991
      %v1427 = vpop.f32.mrb[0].mxu0
      %v1428 = vadd.f32 %v1331, %v1427
      %v1429 = vpop.f32.mrb[0].mxu0
      %v1430 = vpop.f32.mrb[0].mxu0
      %v1431 = vadd.f32 %v1334, %v1430
      %v1432 = vpop.f32.mrb[0].mxu0
      %1433 = vmatprep.mubr.bf16.mxu0 %v1050
      %1434 = vmatmul.mubr.bf16.gmra.mrb[0].mxu0 %v995
      %v1435 = vpop.f32.mrb[0].mxu0
      %v1436 = vadd.f32 %v1339, %v1435
      %v1437 = vpop.f32.mrb[0].mxu0
      %v1438 = vpop.f32.mrb[0].mxu0
      %v1439 = vadd.f32 %v1342, %v1438
      %v1440 = vpop.f32.mrb[0].mxu0
      %1441 = vmatprep.mubr.bf16.mxu0 %v1053
      %1442 = vmatmul.mubr.bf16.gmra.mrb[0].mxu0 %v999
      %v1443 = vpop.f32.mrb[0].mxu0
      %v1444 = vadd.f32 %v1347, %v1443
      %v1445 = vpop.f32.mrb[0].mxu0
      %v1446 = vpop.f32.mrb[0].mxu0
      %v1447 = vadd.f32 %v1350, %v1446
      %v1448 = vpop.f32.mrb[0].mxu0
      %1449 = vmatprep.mubr.bf16.mxu0 %v1056
      %1450 = vmatmul.mubr.bf16.gmra.mrb[0].mxu0 %v1003
      %v1451 = vpop.f32.mrb[0].mxu0
      %v1452 = vadd.f32 %v1355, %v1451
      %v1453 = vpop.f32.mrb[0].mxu0
      %v1454 = vpop.f32.mrb[0].mxu0
      %v1455 = vadd.f32 %v1358, %v1454
      %v1456 = vpop.f32.mrb[0].mxu0
      %1457 = vmatprep.mubr.bf16.mxu0 %v1059
      %1458 = vmatmul.mubr.bf16.gmra.mrb[0].mxu0 %v1007
      %v1459 = vpop.f32.mrb[0].mxu0
      %v1460 = vadd.f32 %v1363, %v1459
      %v1461 = vpop.f32.mrb[0].mxu0
      %v1462 = vpop.f32.mrb[0].mxu0
      %v1463 = vadd.f32 %v1366, %v1462
      %v1464 = vpop.f32.mrb[0].mxu0
      %1465 = vmatprep.mubr.bf16.mxu0 %v1062
      %1466 = vmatmul.mubr.bf16.gmra.mrb[0].mxu0 %v1011
      %v1467 = vpop.f32.mrb[0].mxu0
      %v1468 = vadd.f32 %v1371, %v1467
      %v1469 = vpop.f32.mrb[0].mxu0
      %v1470 = vpop.f32.mrb[0].mxu0
      %v1471 = vadd.f32 %v1374, %v1470
      %v1472 = vpop.f32.mrb[0].mxu0
      %1473 = vmatprep.mubr.bf16.mxu0 %v1065
      %1474 = vmatmul.mubr.bf16.gmra.mrb[0].mxu0 %v1015
      %v1475 = vpop.f32.mrb[0].mxu0
      %v1476 = vadd.f32 %v1379, %v1475
      %v1477 = vpop.f32.mrb[0].mxu0
      %v1478 = vpop.f32.mrb[0].mxu0
      %v1479 = vadd.f32 %v1382, %v1478
      %v1480 = vpop.f32.mrb[0].mxu0
      %1481 = vmatprep.mubr.bf16.mxu0 %v1068
      %1482 = vmatmul.mubr.bf16.gmra.mrb[0].mxu0 %v1019
      %v1483 = vpop.f32.mrb[0].mxu0
      %v1484 = vadd.f32 %v1387, %v1483
      %v1485 = vpop.f32.mrb[0].mxu0
      %v1486 = vpop.f32.mrb[0].mxu0
      %v1487 = vadd.f32 %v1390, %v1486
      %v1488 = vpop.f32.mrb[0].mxu0
      %1489 = vdwg.mxu0
      %1490 = vst [vmem:[#allocation3] sm:$0xff] %v1218
      %1491 = vst [vmem:[#allocation3 + $0x8] sm:$0xff] %v1220
      %1492 = vst [vmem:[#allocation3 + $0x10] sm:$0xff] %v1428
      %1493 = vst [vmem:[#allocation3 + $0x18] sm:$0xff] %v1222
      %1494 = vst [vmem:[#allocation3 + $0x20] sm:$0xff] %v1224
      %1495 = vst [vmem:[#allocation3 + $0x28] sm:$0xff] %v1431
      %1496 = vst [vmem:[#allocation3 + $0x30] sm:$0xff] %v1228
      %1497 = vst [vmem:[#allocation3 + $0x38] sm:$0xff] %v1230
      %1498 = vst [vmem:[#allocation3 + $0x40] sm:$0xff] %v1436
      %1499 = vst [vmem:[#allocation3 + $0x48] sm:$0xff] %v1232
      %1500 = vst [vmem:[#allocation3 + $0x50] sm:$0xff] %v1234
      %1501 = vst [vmem:[#allocation3 + $0x58] sm:$0xff] %v1439
      %1502 = vst [vmem:[#allocation3 + $0x60] sm:$0xff] %v1238
      %1503 = vst [vmem:[#allocation3 + $0x68] sm:$0xff] %v1240
      %1504 = vst [vmem:[#allocation3 + $0x70] sm:$0xff] %v1444
      %1505 = vst [vmem:[#allocation3 + $0x78] sm:$0xff] %v1242
      %1506 = vst [vmem:[#allocation3 + $0x80] sm:$0xff] %v1244
      %1507 = vst [vmem:[#allocation3 + $0x88] sm:$0xff] %v1447
      %1508 = vst [vmem:[#allocation3 + $0x90] sm:$0xff] %v1248
      %1509 = vst [vmem:[#allocation3 + $0x98] sm:$0xff] %v1250
      %1510 = vst [vmem:[#allocation3 + $0xa0] sm:$0xff] %v1452
      %1511 = vst [vmem:[#allocation3 + $0xa8] sm:$0xff] %v1252
      %1512 = vst [vmem:[#allocation3 + $0xb0] sm:$0xff] %v1254
      %1513 = vst [vmem:[#allocation3 + $0xb8] sm:$0xff] %v1455
      %1514 = vst [vmem:[#allocation3 + $0xc0] sm:$0xff] %v1258
      %1515 = vst [vmem:[#allocation3 + $0xc8] sm:$0xff] %v1260
      %1516 = vst [vmem:[#allocation3 + $0xd0] sm:$0xff] %v1460
      %1517 = vst [vmem:[#allocation3 + $0xd8] sm:$0xff] %v1262
      %1518 = vst [vmem:[#allocation3 + $0xe0] sm:$0xff] %v1264
      %1519 = vst [vmem:[#allocation3 + $0xe8] sm:$0xff] %v1463
      %1520 = vst [vmem:[#allocation3 + $0xf0] sm:$0xff] %v1268
      %1521 = vst [vmem:[#allocation3 + $0xf8] sm:$0xff] %v1270
      %1522 = vst [vmem:[#allocation3 + $0x100] sm:$0xff] %v1468
      %1523 = vst [vmem:[#allocation3 + $0x108] sm:$0xff] %v1272
      %1524 = vst [vmem:[#allocation3 + $0x110] sm:$0xff] %v1274
      %1525 = vst [vmem:[#allocation3 + $0x118] sm:$0xff] %v1471
      %1526 = vst [vmem:[#allocation3 + $0x120] sm:$0xff] %v1278
      %1527 = vst [vmem:[#allocation3 + $0x128] sm:$0xff] %v1280
      %1528 = vst [vmem:[#allocation3 + $0x130] sm:$0xff] %v1476
      %1529 = vst [vmem:[#allocation3 + $0x138] sm:$0xff] %v1282
      %1530 = vst [vmem:[#allocation3 + $0x140] sm:$0xff] %v1284
      %1531 = vst [vmem:[#allocation3 + $0x148] sm:$0xff] %v1479
      %1532 = vst [vmem:[#allocation3 + $0x150] sm:$0xff] %v1288
      %1533 = vst [vmem:[#allocation3 + $0x158] sm:$0xff] %v1290
      %1534 = vst [vmem:[#allocation3 + $0x160] sm:$0xff] %v1484
      %1535 = vst [vmem:[#allocation3 + $0x168] sm:$0xff] %v1292
      %1536 = vst [vmem:[#allocation3 + $0x170] sm:$0xff] %v1294
      %1537 = vst [vmem:[#allocation3 + $0x178] sm:$0xff] %v1487
      %v1538 = vld [vmem:[%s274] sm:$0xff]
      %v1539 = vld [vmem:[%s274 + $0x8] sm:$0xff]
      %v1540 = vld [vmem:[%s274 + $0x10] sm:$0xff]
      %v1541 = vld [vmem:[%s274 + $0x18] sm:$0xff]
      %v1542 = vld [vmem:[%s274 + $0x20] sm:$0xff]
      %v1543 = vld [vmem:[%s274 + $0x28] sm:$0xff]
      %v1544 = vld [vmem:[%s274 + $0x30] sm:$0xff]
      %v1545 = vld [vmem:[%s274 + $0x38] sm:$0xff]
      %v1546 = vld [vmem:[%s274 + $0x40] sm:$0xff]
      %v1547 = vld [vmem:[%s274 + $0x48] sm:$0xff]
      %v1548 = vld [vmem:[%s274 + $0x50] sm:$0xff]
      %v1549 = vld [vmem:[%s274 + $0x58] sm:$0xff]
      %v1550 = vld [vmem:[#allocation3] sm:$0xff]
      %v1551 = vld [vmem:[#allocation3 + $0x8] sm:$0xff]
      %v1552 = vld [vmem:[#allocation3 + $0x10] sm:$0xff]
      %v1553 = vld [vmem:[#allocation3 + $0x18] sm:$0xff]
      %v1554 = vld [vmem:[#allocation3 + $0x20] sm:$0xff]
      %v1555 = vld [vmem:[#allocation3 + $0x28] sm:$0xff]
      %v1556 = vld [vmem:[#allocation3 + $0x30] sm:$0xff]
      %v1557 = vld [vmem:[#allocation3 + $0x38] sm:$0xff]
      %v1558 = vld [vmem:[#allocation3 + $0x40] sm:$0xff]
      %v1559 = vld [vmem:[#allocation3 + $0x48] sm:$0xff]
      %v1560 = vld [vmem:[#allocation3 + $0x50] sm:$0xff]
      %v1561 = vld [vmem:[#allocation3 + $0x58] sm:$0xff]
      %v1562 = vld [vmem:[%s3] sm:$0xff]
      %v1563 = vld [vmem:[%s3 + $0x8] sm:$0xff]
      %v1564 = vld [vmem:[%s3 + $0x10] sm:$0xff]
      %v1565 = vld [vmem:[%s3 + $0x18] sm:$0xff]
      %1567 = vset.pattern.permute.xlu0 0
      %1568 = vperm.xlu0 %1567, %v1562
      %v1569 = vpop.permute.xlu0 %1568
      %1572 = vset.pattern.permute.xlu0 0
      %1573 = vperm.xlu0 %1572, %v1563
      %v1574 = vpop.permute.xlu0 %1573
      %1577 = vset.pattern.permute.xlu0 0
      %1578 = vperm.xlu0 %1577, %v1564
      %v1579 = vpop.permute.xlu0 %1578
      %1582 = vset.pattern.permute.xlu0 0
      %1583 = vperm.xlu0 %1582, %v1565
      %v1584 = vpop.permute.xlu0 %1583
      %v1586 = vadd.f32 %v1550, %v1569
      %v1587 = vadd.f32 %v1551, %v1569
      %v1588 = vadd.f32 %v1552, %v1569
      %v1589 = vadd.f32 %v1553, %v1574
      %v1590 = vadd.f32 %v1554, %v1574
      %v1591 = vadd.f32 %v1555, %v1574
      %v1592 = vadd.f32 %v1556, %v1579
      %v1593 = vadd.f32 %v1557, %v1579
      %v1594 = vadd.f32 %v1558, %v1579
      %v1595 = vadd.f32 %v1559, %v1584
      %v1596 = vadd.f32 %v1560, %v1584
      %v1597 = vadd.f32 %v1561, %v1584
      %v1598 = vld [vmem:[%s4] sm:$0xff]
      %v1599 = vld [vmem:[%s4 + $0x8] sm:$0xff]
      %v1600 = vld [vmem:[%s4 + $0x10] sm:$0xff]
      %v1601 = vld [vmem:[%s4 + $0x18] sm:$0xff]
      %1603 = vset.pattern.permute.xlu0 0
      %1604 = vperm.xlu0 %1603, %v1598
      %v1605 = vpop.permute.xlu0 %1604
      %1608 = vset.pattern.permute.xlu0 0
      %1609 = vperm.xlu0 %1608, %v1599
      %v1610 = vpop.permute.xlu0 %1609
      %1613 = vset.pattern.permute.xlu0 0
      %1614 = vperm.xlu0 %1613, %v1600
      %v1615 = vpop.permute.xlu0 %1614
      %1618 = vset.pattern.permute.xlu0 0
      %1619 = vperm.xlu0 %1618, %v1601
      %v1620 = vpop.permute.xlu0 %1619
      %v1622 = vmul.f32 %v1605, %v1538
      %v1623 = vmul.f32 %v1605, %v1539
      %v1624 = vmul.f32 %v1605, %v1540
      %v1625 = vmul.f32 %v1610, %v1541
      %v1626 = vmul.f32 %v1610, %v1542
      %v1627 = vmul.f32 %v1610, %v1543
      %v1628 = vmul.f32 %v1615, %v1544
      %v1629 = vmul.f32 %v1615, %v1545
      %v1630 = vmul.f32 %v1615, %v1546
      %v1631 = vmul.f32 %v1620, %v1547
      %v1632 = vmul.f32 %v1620, %v1548
      %v1633 = vmul.f32 %v1620, %v1549
      %v1634 = vadd.f32 %v1586, %v1622
      %v1635 = vadd.f32 %v1587, %v1623
      %v1636 = vadd.f32 %v1588, %v1624
      %v1637 = vadd.f32 %v1589, %v1625
      %v1638 = vadd.f32 %v1590, %v1626
      %v1639 = vadd.f32 %v1591, %v1627
      %v1640 = vadd.f32 %v1592, %v1628
      %v1641 = vadd.f32 %v1593, %v1629
      %v1642 = vadd.f32 %v1594, %v1630
      %v1643 = vadd.f32 %v1595, %v1631
      %v1644 = vadd.f32 %v1596, %v1632
      %v1645 = vadd.f32 %v1597, %v1633
      %v1646 = vmul.f32 %v1634, 0.5
      %v1647 = vmul.f32 %v1635, 0.5
      %v1648 = vmul.f32 %v1636, 0.5
      %v1649 = vmul.f32 %v1637, 0.5
      %v1650 = vmul.f32 %v1638, 0.5
      %v1651 = vmul.f32 %v1639, 0.5
      %v1652 = vmul.f32 %v1640, 0.5
      %v1653 = vmul.f32 %v1641, 0.5
      %v1654 = vmul.f32 %v1642, 0.5
      %v1655 = vmul.f32 %v1643, 0.5
      %v1656 = vmul.f32 %v1644, 0.5
      %v1657 = vmul.f32 %v1645, 0.5
      %v1658 = vtanh.pop %v1646
      %v1659 = vtanh.pop %v1647
      %v1660 = vtanh.pop %v1648
      %v1661 = vtanh.pop %v1649
      %v1662 = vtanh.pop %v1650
      %v1663 = vtanh.pop %v1651
      %v1664 = vtanh.pop %v1652
      %v1665 = vtanh.pop %v1653
      %v1666 = vtanh.pop %v1654
      %v1667 = vtanh.pop %v1655
      %v1668 = vtanh.pop %v1656
      %v1669 = vtanh.pop %v1657
      %v1670 = vmul.f32 %v1658, 0.5
      %v1671 = vmul.f32 %v1659, 0.5
      %v1672 = vmul.f32 %v1660, 0.5
      %v1673 = vmul.f32 %v1661, 0.5
      %v1674 = vmul.f32 %v1662, 0.5
      %v1675 = vmul.f32 %v1663, 0.5
      %v1676 = vmul.f32 %v1664, 0.5
      %v1677 = vmul.f32 %v1665, 0.5
      %v1678 = vmul.f32 %v1666, 0.5
      %v1679 = vmul.f32 %v1667, 0.5
      %v1680 = vmul.f32 %v1668, 0.5
      %v1681 = vmul.f32 %v1669, 0.5
      %v1682 = vadd.f32 %v1670, 0.5
      %v1683 = vadd.f32 %v1671, 0.5
      %v1684 = vadd.f32 %v1672, 0.5
      %v1685 = vadd.f32 %v1673, 0.5
      %v1686 = vadd.f32 %v1674, 0.5
      %v1687 = vadd.f32 %v1675, 0.5
      %v1688 = vadd.f32 %v1676, 0.5
      %v1689 = vadd.f32 %v1677, 0.5
      %v1690 = vadd.f32 %v1678, 0.5
      %v1691 = vadd.f32 %v1679, 0.5
      %v1692 = vadd.f32 %v1680, 0.5
      %v1693 = vadd.f32 %v1681, 0.5
      %v1694 = vld [vmem:[#allocation3 + $0x60] sm:$0xff]
      %v1695 = vld [vmem:[#allocation3 + $0x68] sm:$0xff]
      %v1696 = vld [vmem:[#allocation3 + $0x70] sm:$0xff]
      %v1697 = vld [vmem:[#allocation3 + $0x78] sm:$0xff]
      %v1698 = vld [vmem:[#allocation3 + $0x80] sm:$0xff]
      %v1699 = vld [vmem:[#allocation3 + $0x88] sm:$0xff]
      %v1700 = vld [vmem:[#allocation3 + $0x90] sm:$0xff]
      %v1701 = vld [vmem:[#allocation3 + $0x98] sm:$0xff]
      %v1702 = vld [vmem:[#allocation3 + $0xa0] sm:$0xff]
      %v1703 = vld [vmem:[#allocation3 + $0xa8] sm:$0xff]
      %v1704 = vld [vmem:[#allocation3 + $0xb0] sm:$0xff]
      %v1705 = vld [vmem:[#allocation3 + $0xb8] sm:$0xff]
      %v1706 = vld [vmem:[%s3 + $0x20] sm:$0xff]
      %v1707 = vld [vmem:[%s3 + $0x28] sm:$0xff]
      %v1708 = vld [vmem:[%s3 + $0x30] sm:$0xff]
      %v1709 = vld [vmem:[%s3 + $0x38] sm:$0xff]
      %1711 = vset.pattern.permute.xlu0 0
      %1712 = vperm.xlu0 %1711, %v1706
      %v1713 = vpop.permute.xlu0 %1712
      %1716 = vset.pattern.permute.xlu0 0
      %1717 = vperm.xlu0 %1716, %v1707
      %v1718 = vpop.permute.xlu0 %1717
      %1721 = vset.pattern.permute.xlu0 0
      %1722 = vperm.xlu0 %1721, %v1708
      %v1723 = vpop.permute.xlu0 %1722
      %1726 = vset.pattern.permute.xlu0 0
      %1727 = vperm.xlu0 %1726, %v1709
      %v1728 = vpop.permute.xlu0 %1727
      %v1730 = vadd.f32 %v1694, %v1713
      %v1731 = vadd.f32 %v1695, %v1713
      %v1732 = vadd.f32 %v1696, %v1713
      %v1733 = vadd.f32 %v1697, %v1718
      %v1734 = vadd.f32 %v1698, %v1718
      %v1735 = vadd.f32 %v1699, %v1718
      %v1736 = vadd.f32 %v1700, %v1723
      %v1737 = vadd.f32 %v1701, %v1723
      %v1738 = vadd.f32 %v1702, %v1723
      %v1739 = vadd.f32 %v1703, %v1728
      %v1740 = vadd.f32 %v1704, %v1728
      %v1741 = vadd.f32 %v1705, %v1728
      %s1742 = scalar_lea.vmem %s4, 32
      %v1743 = vld [vmem:[%s1742] sm:$0xff]
      %v1744 = vld [vmem:[%s1742 + $0x8] sm:$0xff]
      %v1745 = vld [vmem:[%s1742 + $0x10] sm:$0xff]
      %v1746 = vld [vmem:[%s1742 + $0x18] sm:$0xff]
      %1748 = vset.pattern.permute.xlu0 0
      %1749 = vperm.xlu0 %1748, %v1743
      %v1750 = vpop.permute.xlu0 %1749
      %1753 = vset.pattern.permute.xlu0 0
      %1754 = vperm.xlu0 %1753, %v1744
      %v1755 = vpop.permute.xlu0 %1754
      %1758 = vset.pattern.permute.xlu0 0
      %1759 = vperm.xlu0 %1758, %v1745
      %v1760 = vpop.permute.xlu0 %1759
      %1763 = vset.pattern.permute.xlu0 0
      %1764 = vperm.xlu0 %1763, %v1746
      %v1765 = vpop.permute.xlu0 %1764
      %v1767 = vmul.f32 %v1750, %v1538
      %v1768 = vmul.f32 %v1750, %v1539
      %v1769 = vmul.f32 %v1750, %v1540
      %v1770 = vmul.f32 %v1755, %v1541
      %v1771 = vmul.f32 %v1755, %v1542
      %v1772 = vmul.f32 %v1755, %v1543
      %v1773 = vmul.f32 %v1760, %v1544
      %v1774 = vmul.f32 %v1760, %v1545
      %v1775 = vmul.f32 %v1760, %v1546
      %v1776 = vmul.f32 %v1765, %v1547
      %v1777 = vmul.f32 %v1765, %v1548
      %v1778 = vmul.f32 %v1765, %v1549
      %v1779 = vadd.f32 %v1730, %v1767
      %v1780 = vadd.f32 %v1731, %v1768
      %v1781 = vadd.f32 %v1732, %v1769
      %v1782 = vadd.f32 %v1733, %v1770
      %v1783 = vadd.f32 %v1734, %v1771
      %v1784 = vadd.f32 %v1735, %v1772
      %v1785 = vadd.f32 %v1736, %v1773
      %v1786 = vadd.f32 %v1737, %v1774
      %v1787 = vadd.f32 %v1738, %v1775
      %v1788 = vadd.f32 %v1739, %v1776
      %v1789 = vadd.f32 %v1740, %v1777
      %v1790 = vadd.f32 %v1741, %v1778
      %v1791 = vmul.f32 %v1779, 0.5
      %v1792 = vmul.f32 %v1780, 0.5
      %v1793 = vmul.f32 %v1781, 0.5
      %v1794 = vmul.f32 %v1782, 0.5
      %v1795 = vmul.f32 %v1783, 0.5
      %v1796 = vmul.f32 %v1784, 0.5
      %v1797 = vmul.f32 %v1785, 0.5
      %v1798 = vmul.f32 %v1786, 0.5
      %v1799 = vmul.f32 %v1787, 0.5
      %v1800 = vmul.f32 %v1788, 0.5
      %v1801 = vmul.f32 %v1789, 0.5
      %v1802 = vmul.f32 %v1790, 0.5
      %v1803 = vtanh.pop %v1791
      %v1804 = vtanh.pop %v1792
      %v1805 = vtanh.pop %v1793
      %v1806 = vtanh.pop %v1794
      %v1807 = vtanh.pop %v1795
      %v1808 = vtanh.pop %v1796
      %v1809 = vtanh.pop %v1797
      %v1810 = vtanh.pop %v1798
      %v1811 = vtanh.pop %v1799
      %v1812 = vtanh.pop %v1800
      %v1813 = vtanh.pop %v1801
      %v1814 = vtanh.pop %v1802
      %v1815 = vmul.f32 %v1803, 0.5
      %v1816 = vmul.f32 %v1804, 0.5
      %v1817 = vmul.f32 %v1805, 0.5
      %v1818 = vmul.f32 %v1806, 0.5
      %v1819 = vmul.f32 %v1807, 0.5
      %v1820 = vmul.f32 %v1808, 0.5
      %v1821 = vmul.f32 %v1809, 0.5
      %v1822 = vmul.f32 %v1810, 0.5
      %v1823 = vmul.f32 %v1811, 0.5
      %v1824 = vmul.f32 %v1812, 0.5
      %v1825 = vmul.f32 %v1813, 0.5
      %v1826 = vmul.f32 %v1814, 0.5
      %v1827 = vadd.f32 %v1815, 0.5
      %v1828 = vadd.f32 %v1816, 0.5
      %v1829 = vadd.f32 %v1817, 0.5
      %v1830 = vadd.f32 %v1818, 0.5
      %v1831 = vadd.f32 %v1819, 0.5
      %v1832 = vadd.f32 %v1820, 0.5
      %v1833 = vadd.f32 %v1821, 0.5
      %v1834 = vadd.f32 %v1822, 0.5
      %v1835 = vadd.f32 %v1823, 0.5
      %v1836 = vadd.f32 %v1824, 0.5
      %v1837 = vadd.f32 %v1825, 0.5
      %v1838 = vadd.f32 %v1826, 0.5
      %v1839 = vld [vmem:[#allocation3 + $0xc0] sm:$0xff]
      %v1840 = vld [vmem:[#allocation3 + $0xc8] sm:$0xff]
      %v1841 = vld [vmem:[#allocation3 + $0xd0] sm:$0xff]
      %v1842 = vld [vmem:[#allocation3 + $0xd8] sm:$0xff]
      %v1843 = vld [vmem:[#allocation3 + $0xe0] sm:$0xff]
      %v1844 = vld [vmem:[#allocation3 + $0xe8] sm:$0xff]
      %v1845 = vld [vmem:[#allocation3 + $0xf0] sm:$0xff]
      %v1846 = vld [vmem:[#allocation3 + $0xf8] sm:$0xff]
      %v1847 = vld [vmem:[#allocation3 + $0x100] sm:$0xff]
      %v1848 = vld [vmem:[#allocation3 + $0x108] sm:$0xff]
      %v1849 = vld [vmem:[#allocation3 + $0x110] sm:$0xff]
      %v1850 = vld [vmem:[#allocation3 + $0x118] sm:$0xff]
      %v1851 = vld [vmem:[%s3 + $0x40] sm:$0xff]
      %v1852 = vld [vmem:[%s3 + $0x48] sm:$0xff]
      %v1853 = vld [vmem:[%s3 + $0x50] sm:$0xff]
      %v1854 = vld [vmem:[%s3 + $0x58] sm:$0xff]
      %1856 = vset.pattern.permute.xlu0 0
      %1857 = vperm.xlu0 %1856, %v1851
      %v1858 = vpop.permute.xlu0 %1857
      %1861 = vset.pattern.permute.xlu0 0
      %1862 = vperm.xlu0 %1861, %v1852
      %v1863 = vpop.permute.xlu0 %1862
      %1866 = vset.pattern.permute.xlu0 0
      %1867 = vperm.xlu0 %1866, %v1853
      %v1868 = vpop.permute.xlu0 %1867
      %1871 = vset.pattern.permute.xlu0 0
      %1872 = vperm.xlu0 %1871, %v1854
      %v1873 = vpop.permute.xlu0 %1872
      %v1875 = vadd.f32 %v1839, %v1858
      %v1876 = vadd.f32 %v1840, %v1858
      %v1877 = vadd.f32 %v1841, %v1858
      %v1878 = vadd.f32 %v1842, %v1863
      %v1879 = vadd.f32 %v1843, %v1863
      %v1880 = vadd.f32 %v1844, %v1863
      %v1881 = vadd.f32 %v1845, %v1868
      %v1882 = vadd.f32 %v1846, %v1868
      %v1883 = vadd.f32 %v1847, %v1868
      %v1884 = vadd.f32 %v1848, %v1873
      %v1885 = vadd.f32 %v1849, %v1873
      %v1886 = vadd.f32 %v1850, %v1873
      %v1887 = vtanh.pop %v1875
      %v1888 = vtanh.pop %v1876
      %v1889 = vtanh.pop %v1877
      %v1890 = vtanh.pop %v1878
      %v1891 = vtanh.pop %v1879
      %v1892 = vtanh.pop %v1880
      %v1893 = vtanh.pop %v1881
      %v1894 = vtanh.pop %v1882
      %v1895 = vtanh.pop %v1883
      %v1896 = vtanh.pop %v1884
      %v1897 = vtanh.pop %v1885
      %v1898 = vtanh.pop %v1886
      %v1899 = vmul.f32 %v1827, %v1538
      %v1900 = vmul.f32 %v1828, %v1539
      %v1901 = vmul.f32 %v1829, %v1540
      %v1902 = vmul.f32 %v1830, %v1541
      %v1903 = vmul.f32 %v1831, %v1542
      %v1904 = vmul.f32 %v1832, %v1543
      %v1905 = vmul.f32 %v1833, %v1544
      %v1906 = vmul.f32 %v1834, %v1545
      %v1907 = vmul.f32 %v1835, %v1546
      %v1908 = vmul.f32 %v1836, %v1547
      %v1909 = vmul.f32 %v1837, %v1548
      %v1910 = vmul.f32 %v1838, %v1549
      %v1911 = vmul.f32 %v1682, %v1887
      %v1912 = vmul.f32 %v1683, %v1888
      %v1913 = vmul.f32 %v1684, %v1889
      %v1914 = vmul.f32 %v1685, %v1890
      %v1915 = vmul.f32 %v1686, %v1891
      %v1916 = vmul.f32 %v1687, %v1892
      %v1917 = vmul.f32 %v1688, %v1893
      %v1918 = vmul.f32 %v1689, %v1894
      %v1919 = vmul.f32 %v1690, %v1895
      %v1920 = vmul.f32 %v1691, %v1896
      %v1921 = vmul.f32 %v1692, %v1897
      %v1922 = vmul.f32 %v1693, %v1898
      %v1923 = vadd.f32 %v1899, %v1911
      %v1924 = vadd.f32 %v1900, %v1912
      %v1925 = vadd.f32 %v1901, %v1913
      %v1926 = vadd.f32 %v1902, %v1914
      %v1927 = vadd.f32 %v1903, %v1915
      %v1928 = vadd.f32 %v1904, %v1916
      %v1929 = vadd.f32 %v1905, %v1917
      %v1930 = vadd.f32 %v1906, %v1918
      %v1931 = vadd.f32 %v1907, %v1919
      %v1932 = vadd.f32 %v1908, %v1920
      %v1933 = vadd.f32 %v1909, %v1921
      %v1934 = vadd.f32 %v1910, %v1922
      %v1935 = vld [vmem:[#allocation3 + $0x120] sm:$0xff]
      %v1936 = vld [vmem:[#allocation3 + $0x128] sm:$0xff]
      %v1937 = vld [vmem:[#allocation3 + $0x130] sm:$0xff]
      %v1938 = vld [vmem:[#allocation3 + $0x138] sm:$0xff]
      %v1939 = vld [vmem:[#allocation3 + $0x140] sm:$0xff]
      %v1940 = vld [vmem:[#allocation3 + $0x148] sm:$0xff]
      %v1941 = vld [vmem:[#allocation3 + $0x150] sm:$0xff]
      %v1942 = vld [vmem:[#allocation3 + $0x158] sm:$0xff]
      %v1943 = vld [vmem:[#allocation3 + $0x160] sm:$0xff]
      %v1944 = vld [vmem:[#allocation3 + $0x168] sm:$0xff]
      %v1945 = vld [vmem:[#allocation3 + $0x170] sm:$0xff]
      %v1946 = vld [vmem:[#allocation3 + $0x178] sm:$0xff]
      %v1947 = vld [vmem:[%s3 + $0x60] sm:$0xff]
      %v1948 = vld [vmem:[%s3 + $0x68] sm:$0xff]
      %v1949 = vld [vmem:[%s3 + $0x70] sm:$0xff]
      %v1950 = vld [vmem:[%s3 + $0x78] sm:$0xff]
      %1952 = vset.pattern.permute.xlu0 0
      %1953 = vperm.xlu0 %1952, %v1947
      %v1954 = vpop.permute.xlu0 %1953
      %1957 = vset.pattern.permute.xlu0 0
      %1958 = vperm.xlu0 %1957, %v1948
      %v1959 = vpop.permute.xlu0 %1958
      %1962 = vset.pattern.permute.xlu0 0
      %1963 = vperm.xlu0 %1962, %v1949
      %v1964 = vpop.permute.xlu0 %1963
      %1967 = vset.pattern.permute.xlu0 0
      %1968 = vperm.xlu0 %1967, %v1950
      %v1969 = vpop.permute.xlu0 %1968
      %v1971 = vadd.f32 %v1935, %v1954
      %v1972 = vadd.f32 %v1936, %v1954
      %v1973 = vadd.f32 %v1937, %v1954
      %v1974 = vadd.f32 %v1938, %v1959
      %v1975 = vadd.f32 %v1939, %v1959
      %v1976 = vadd.f32 %v1940, %v1959
      %v1977 = vadd.f32 %v1941, %v1964
      %v1978 = vadd.f32 %v1942, %v1964
      %v1979 = vadd.f32 %v1943, %v1964
      %v1980 = vadd.f32 %v1944, %v1969
      %v1981 = vadd.f32 %v1945, %v1969
      %v1982 = vadd.f32 %v1946, %v1969
      %s1983 = scalar_lea.vmem %s4, 64
      %v1984 = vld [vmem:[%s1983] sm:$0xff]
      %v1985 = vld [vmem:[%s1983 + $0x8] sm:$0xff]
      %v1986 = vld [vmem:[%s1983 + $0x10] sm:$0xff]
      %v1987 = vld [vmem:[%s1983 + $0x18] sm:$0xff]
      %1989 = vset.pattern.permute.xlu0 0
      %1990 = vperm.xlu0 %1989, %v1984
      %v1991 = vpop.permute.xlu0 %1990
      %1994 = vset.pattern.permute.xlu0 0
      %1995 = vperm.xlu0 %1994, %v1985
      %v1996 = vpop.permute.xlu0 %1995
      %1999 = vset.pattern.permute.xlu0 0
      %2000 = vperm.xlu0 %1999, %v1986
      %v2001 = vpop.permute.xlu0 %2000
      %2004 = vset.pattern.permute.xlu0 0
      %2005 = vperm.xlu0 %2004, %v1987
      %v2006 = vpop.permute.xlu0 %2005
      %v2008 = vmul.f32 %v1991, %v1923
      %v2009 = vmul.f32 %v1991, %v1924
      %v2010 = vmul.f32 %v1991, %v1925
      %v2011 = vmul.f32 %v1996, %v1926
      %v2012 = vmul.f32 %v1996, %v1927
      %v2013 = vmul.f32 %v1996, %v1928
      %v2014 = vmul.f32 %v2001, %v1929
      %v2015 = vmul.f32 %v2001, %v1930
      %v2016 = vmul.f32 %v2001, %v1931
      %v2017 = vmul.f32 %v2006, %v1932
      %v2018 = vmul.f32 %v2006, %v1933
      %v2019 = vmul.f32 %v2006, %v1934
      %v2020 = vadd.f32 %v1971, %v2008
      %v2021 = vadd.f32 %v1972, %v2009
      %v2022 = vadd.f32 %v1973, %v2010
      %v2023 = vadd.f32 %v1974, %v2011
      %v2024 = vadd.f32 %v1975, %v2012
      %v2025 = vadd.f32 %v1976, %v2013
      %v2026 = vadd.f32 %v1977, %v2014
      %v2027 = vadd.f32 %v1978, %v2015
      %v2028 = vadd.f32 %v1979, %v2016
      %v2029 = vadd.f32 %v1980, %v2017
      %v2030 = vadd.f32 %v1981, %v2018
      %v2031 = vadd.f32 %v1982, %v2019
      %v2032 = vmul.f32 %v2020, 0.5
      %v2033 = vmul.f32 %v2021, 0.5
      %v2034 = vmul.f32 %v2022, 0.5
      %v2035 = vmul.f32 %v2023, 0.5
      %v2036 = vmul.f32 %v2024, 0.5
      %v2037 = vmul.f32 %v2025, 0.5
      %v2038 = vmul.f32 %v2026, 0.5
      %v2039 = vmul.f32 %v2027, 0.5
      %v2040 = vmul.f32 %v2028, 0.5
      %v2041 = vmul.f32 %v2029, 0.5
      %v2042 = vmul.f32 %v2030, 0.5
      %v2043 = vmul.f32 %v2031, 0.5
      %v2044 = vtanh.pop %v2032
      %v2045 = vtanh.pop %v2033
      %v2046 = vtanh.pop %v2034
      %v2047 = vtanh.pop %v2035
      %v2048 = vtanh.pop %v2036
      %v2049 = vtanh.pop %v2037
      %v2050 = vtanh.pop %v2038
      %v2051 = vtanh.pop %v2039
      %v2052 = vtanh.pop %v2040
      %v2053 = vtanh.pop %v2041
      %v2054 = vtanh.pop %v2042
      %v2055 = vtanh.pop %v2043
      %v2056 = vmul.f32 %v2044, 0.5
      %v2057 = vmul.f32 %v2045, 0.5
      %v2058 = vmul.f32 %v2046, 0.5
      %v2059 = vmul.f32 %v2047, 0.5
      %v2060 = vmul.f32 %v2048, 0.5
      %v2061 = vmul.f32 %v2049, 0.5
      %v2062 = vmul.f32 %v2050, 0.5
      %v2063 = vmul.f32 %v2051, 0.5
      %v2064 = vmul.f32 %v2052, 0.5
      %v2065 = vmul.f32 %v2053, 0.5
      %v2066 = vmul.f32 %v2054, 0.5
      %v2067 = vmul.f32 %v2055, 0.5
      %v2068 = vadd.f32 %v2056, 0.5
      %v2069 = vadd.f32 %v2057, 0.5
      %v2070 = vadd.f32 %v2058, 0.5
      %v2071 = vadd.f32 %v2059, 0.5
      %v2072 = vadd.f32 %v2060, 0.5
      %v2073 = vadd.f32 %v2061, 0.5
      %v2074 = vadd.f32 %v2062, 0.5
      %v2075 = vadd.f32 %v2063, 0.5
      %v2076 = vadd.f32 %v2064, 0.5
      %v2077 = vadd.f32 %v2065, 0.5
      %v2078 = vadd.f32 %v2066, 0.5
      %v2079 = vadd.f32 %v2067, 0.5
      %v2080 = vtanh.pop %v1923
      %v2081 = vtanh.pop %v1924
      %v2082 = vtanh.pop %v1925
      %v2083 = vtanh.pop %v1926
      %v2084 = vtanh.pop %v1927
      %v2085 = vtanh.pop %v1928
      %v2086 = vtanh.pop %v1929
      %v2087 = vtanh.pop %v1930
      %v2088 = vtanh.pop %v1931
      %v2089 = vtanh.pop %v1932
      %v2090 = vtanh.pop %v1933
      %v2091 = vtanh.pop %v1934
      %v2092 = vmul.f32 %v2068, %v2080
      %v2093 = vmul.f32 %v2069, %v2081
      %v2094 = vmul.f32 %v2070, %v2082
      %v2095 = vmul.f32 %v2071, %v2083
      %v2096 = vmul.f32 %v2072, %v2084
      %v2097 = vmul.f32 %v2073, %v2085
      %v2098 = vmul.f32 %v2074, %v2086
      %v2099 = vmul.f32 %v2075, %v2087
      %v2100 = vmul.f32 %v2076, %v2088
      %v2101 = vmul.f32 %v2077, %v2089
      %v2102 = vmul.f32 %v2078, %v2090
      %v2103 = vmul.f32 %v2079, %v2091
      %v2104 = vpack.c.bf16 %v2095, %v2092
      %v2105 = vpack.c.bf16 %v2096, %v2093
      %v2106 = vpack.c.bf16 %v2097, %v2094
      %v2107 = vpack.c.bf16 %v2101, %v2098
      %v2108 = vpack.c.bf16 %v2102, %v2099
      %v2109 = vpack.c.bf16 %v2103, %v2100
      %v2116 = vunpack.c.l.b16 %v2104
      %v2117 = vunpack.c.l.b16 %v2105
      %v2118 = vunpack.c.l.b16 %v2106
      %v2119 = vunpack.c.h.b16 %v2104
      %v2120 = vunpack.c.h.b16 %v2105
      %v2121 = vunpack.c.h.b16 %v2106
      %v2122 = vunpack.c.l.b16 %v2107
      %v2123 = vunpack.c.l.b16 %v2108
      %v2124 = vunpack.c.l.b16 %v2109
      %v2125 = vunpack.c.h.b16 %v2107
      %v2126 = vunpack.c.h.b16 %v2108
      %v2127 = vunpack.c.h.b16 %v2109
      %v2128 = vpack.c.b16 %v2117, %v2116
      %v2129 = vpack.c.b16 %v2118, %v2118
      %v2130 = vpack.c.b16 %v2120, %v2119
      %v2131 = vpack.c.b16 %v2121, %v2121
      %v2132 = vpack.c.b16 %v2123, %v2122
      %v2133 = vpack.c.b16 %v2124, %v2124
      %v2134 = vpack.c.b16 %v2126, %v2125
      %v2135 = vpack.c.b16 %v2127, %v2127
      %2144 = vst [vmem:[%s279] sm:$0xff] %v2128
      %2145 = vst [vmem:[%s279 + $0x8] sm:$0xf] %v2129
      %2146 = vst [vmem:[%s279 + $0xc] sm:$0xff] %v2130
      %2147 = vst [vmem:[%s279 + $0x14] sm:$0xf] %v2131
      %2148 = vst [vmem:[%s279 + $0x18] sm:$0xff] %v2132
      %2149 = vst [vmem:[%s279 + $0x20] sm:$0xf] %v2133
      %2150 = vst [vmem:[%s279 + $0x24] sm:$0xff] %v2134
      %2151 = vst [vmem:[%s279 + $0x2c] sm:$0xf] %v2135
      %2152 = vst [vmem:[%s284] sm:$0xff] %v1923
      %2153 = vst [vmem:[%s284 + $0x8] sm:$0xff] %v1924
      %2154 = vst [vmem:[%s284 + $0x10] sm:$0xff] %v1925
      %2155 = vst [vmem:[%s284 + $0x18] sm:$0xff] %v1926
      %2156 = vst [vmem:[%s284 + $0x20] sm:$0xff] %v1927
      %2157 = vst [vmem:[%s284 + $0x28] sm:$0xff] %v1928
      %2158 = vst [vmem:[%s284 + $0x30] sm:$0xff] %v1929
      %2159 = vst [vmem:[%s284 + $0x38] sm:$0xff] %v1930
      %2160 = vst [vmem:[%s284 + $0x40] sm:$0xff] %v1931
      %2161 = vst [vmem:[%s284 + $0x48] sm:$0xff] %v1932
      %2162 = vst [vmem:[%s284 + $0x50] sm:$0xff] %v1933
      %2163 = vst [vmem:[%s284 + $0x58] sm:$0xff] %v1934
      %p2164 = scmp.lt.s32.totalorder %s18, 1
      %s2165 = scalar_select %p2164, %s18, 1
      %s2166 = smul.addr %s2165, 12
      %s2167 = smul.addr %s2166, 4
      %s2168 = scalar_lea.vmem %s5, %s2167
      %p2169 = scmp.lt.s32.totalorder %s18, 1
      %s2170 = scalar_select %p2169, %s18, 1
      %s2171 = smul.addr %s2170, 12
      %s2172 = smul.addr %s2171, 8
      %s2173 = scalar_lea.vmem %s6, %s2172
      // Predicated region
      $region41: #{_lambda_.1} parent=39 // pred_check
        %p2174 = pneg %p151
      $region42: #{_lambda_.1} parent=39 // pred_check_branch
        %2176 = sbr.rel (%p2174) target = $region44
      $region43: #{_lambda_.1} parent=39 // pred_region
        _
      $region44: #{_lambda_.1} parent=39 // pred_fallthru
        _
      // Predicated region
      $region45: #{_lambda_.1} parent=39 // pred_check
        %p2177 = pneg %p177
      $region46: #{_lambda_.1} parent=39 // pred_check_branch
        %2179 = sbr.rel (%p2177) target = $region48
      $region47: #{_lambda_.1} parent=39 // pred_region
        _
      $region48: #{_lambda_.1} parent=39 // pred_fallthru
        _
    $region40: #{_lambda_.1} parent=5 // pred_fallthru
      _
    %p2180 = scmp.le.s32.totalorder 2, %s13
    // Predicated region
    $region49: #{_lambda_.1} parent=5 // pred_check
      %p2181 = pneg %p2180
    $region50: #{_lambda_.1} parent=5 // pred_check_branch
      %2183 = sbr.rel (%p2181) target = $region52
    $region51: #{_lambda_.1} parent=5 // pred_region
      %s2184 = ssub.s32 %s13, 2
      // Predicated region
      $region53: #{_lambda_.1} parent=51 // pred_check
        %p2185 = pneg %p157
      $region54: #{_lambda_.1} parent=51 // pred_check_branch
        %2187 = sbr.rel (%p2185) target = $region56
      $region55: #{_lambda_.1} parent=51 // pred_region
        %p2188 = scmp.lt.s32.totalorder %s19, 1
        %s2189 = scalar_select %p2188, %s19, 1
        %s2190 = smul.addr %s2189, 12
        %s2191 = smul.addr %s2190, 4
        %s2192 = scalar_lea.vmem %s5, %s2191
      $region56: #{_lambda_.1} parent=51 // pred_fallthru
        _
      // Predicated region
      $region57: #{_lambda_.1} parent=51 // pred_check
        %p2193 = pneg %p183
      $region58: #{_lambda_.1} parent=51 // pred_check_branch
        %2195 = sbr.rel (%p2193) target = $region60
      $region59: #{_lambda_.1} parent=51 // pred_region
        %p2196 = scmp.lt.s32.totalorder %s19, 1
        %s2197 = scalar_select %p2196, %s19, 1
        %s2198 = smul.addr %s2197, 12
        %s2199 = smul.addr %s2198, 8
        %s2200 = scalar_lea.vmem %s6, %s2199
      $region60: #{_lambda_.1} parent=51 // pred_fallthru
        _
    $region52: #{_lambda_.1} parent=5 // pred_fallthru
      _
  $region6: #{_lambda_.1} parent=0 // loop_footer
    %s17 = sadd.s32 1, %s13
  $region7: #{_lambda_.1} parent=0 // loop_footer_branch
    %12 = sbr.rel target = $region3
  $region8: #{_lambda_.1} parent=0 // loop_exit
    _

</llo_original>
